<compile_context>
chip_gen: v5e
topology: v5e:2x2
jax: 0.10.0
libtpu: 0.0.40
codegen_flags: <defaults>
</compile_context>

<pallas_src>
import jax
import jax.numpy as jnp
from jax import lax
from jax.experimental import pallas as pl
from jax.experimental.pallas import tpu as pltpu

LANES = 128
NUM_ACC = 6       # [coord_sq, cfd_obj, cfd_nob, cls, n_obj, n_nob]
ROW_ALIGN = 32    # covers f32 (8), bf16 (16), int8/fp8 (32) sublane tiling
CHUNK = 32        # rows per in-kernel streaming chunk (keeps temps at vreg scale)


def _cdiv(a, b):
    return -(-a // b)


def _round_up(a, b):
    return _cdiv(a, b) * b


def _bce_binary(p, t):
    # Single-log BCE, exact for binary targets t in {0,1} (YOLO targets are binary)
    # and identical to torch.nn.BCELoss's per-term -100 log clamp.
    q = t * p + (1.0 - t) * (1.0 - p)
    return -jnp.maximum(jnp.log(q), -100.0)


def _default_cores_and_vmem():
    """Generation-aware defaults: (num_cores, vmem_limit_bytes)."""
    try:
        kind = jax.devices()[0].device_kind.lower()
    except Exception:
        kind = ""
    if "v7" in kind or "tpu7" in kind:
        # 2 TensorCores, only 64 MiB VMEM per core -> keep headroom.
        return 2, 40 * 1024 * 1024
    # v5e / v6e: single TensorCore, 128 MiB physical VMEM.
    return 1, 64 * 1024 * 1024


def l1smooth_loss(x, y, w, h, predcfd, predcls,
                  tx, ty, tw, th, tcfd, tcls,
                  objmask, nobmask, *, objscl=1, nobscl=100,
                  tile_rows=512, num_cores=None, vmem_limit_bytes=None):
    """Per-location args are (N,) or (N, 1); predcls/tcls are (N, C); masks are
    {0,1} (any float/bool-like dtype, e.g. bf16).  Returns a scalar f32 loss."""
    auto_cores, auto_vmem = _default_cores_and_vmem()
    if num_cores is None:
        num_cores = auto_cores
    if vmem_limit_bytes is None:
        vmem_limit_bytes = auto_vmem

    per_loc = [jnp.asarray(a) for a in
               (x, y, w, h, predcfd, tx, ty, tw, th, tcfd, objmask, nobmask)]
    predcls = jnp.asarray(predcls)
    tcls = jnp.asarray(tcls)

    N = int(per_loc[0].size)
    C = int(predcls.shape[-1])

    m0 = _cdiv(N, LANES)          # number of valid 128-lane rows
    n128 = m0 * LANES

    # ---- zero-copy (when possible) lane-dense views -------------------------
    def as_rows(a):
        a = jnp.reshape(a, (-1,))                       # free
        if a.shape[0] != n128:                          # ragged tail: one cheap pad
            a = jnp.pad(a, (0, n128 - a.shape[0]))
        return jnp.reshape(a, (m0, LANES))              # free bitcast

    def cls_rows(a):
        # TODO(synk): producer could emit (C, N) directly to avoid this transpose.
        a = jnp.reshape(a, (N, C)).T                    # (C, N): the one kept copy
        if N != n128:
            a = jnp.pad(a, ((0, 0), (0, n128 - N)))
        return jnp.reshape(a, (C, m0, LANES))

    # ---- tile sizing: biggest (tm, 128) row-tile that fits the VMEM budget ----
    bytes_per_row = sum(LANES * jnp.dtype(a.dtype).itemsize for a in per_loc)
    bytes_per_row += C * LANES * (jnp.dtype(predcls.dtype).itemsize
                                  + jnp.dtype(tcls.dtype).itemsize)
    input_budget = vmem_limit_bytes // 2                # half for double-buffered inputs
    tm_cap = (input_budget // (2 * bytes_per_row)) // ROW_ALIGN * ROW_ALIGN
    tm = min(_round_up(tile_rows, ROW_ALIGN),
             max(tm_cap, ROW_ALIGN),
             _round_up(m0, ROW_ALIGN))
    tm = max(tm, ROW_ALIGN)

    nsteps = _cdiv(m0, tm)                              # total row-blocks
    num_cores = max(1, min(int(num_cores), nsteps))
    bpc = _cdiv(nsteps, num_cores)                      # row-blocks per core
    # In-kernel row masking is only needed when a block can contain rows >= m0
    # (partial last block) or a core gets a "ghost" (clamped, duplicated) block.
    needs_mask = (m0 % tm != 0) or (num_cores * bpc != nsteps)
    n_chunks = tm // CHUNK

    f32 = jnp.float32

    def kernel(x_ref, y_ref, w_ref, h_ref, pcfd_ref,
               tx_ref, ty_ref, tw_ref, th_ref, tcfd_ref,
               obj_ref, nob_ref, clsp_ref, clst_ref, out_ref):
        core = pl.program_id(0)
        step = pl.program_id(1)

        # Output block index changes only with `core`; it stays resident across the
        # last ("arbitrary") reduction axis, so zero it at the first step per core.
        @pl.when(step == 0)
        def _init():
            out_ref[...] = jnp.zeros_like(out_ref)

        # Intended (unclamped) global row offset of this block, for tail masking.
        base_row = (core * bpc + step) * tm

        accs = [jnp.zeros((8, LANES), f32) for _ in range(NUM_ACC)]

        for ck in range(n_chunks):                      # static, fully unrolled
            r0 = ck * CHUNK
            sl = pl.ds(r0, CHUNK)

            def ld(ref):
                return ref[sl, :].astype(f32)

            obj = ld(obj_ref)
            nob = ld(nob_ref)

            # Sum the four squared coord diffs first, multiply by obj once.
            d = ld(x_ref) - ld(tx_ref)
            d2 = d * d
            d = ld(y_ref) - ld(ty_ref)
            d2 += d * d
            d = ld(w_ref) - ld(tw_ref)
            d2 += d * d
            d = ld(h_ref) - ld(th_ref)
            d2 += d * d

            bce_cfd = _bce_binary(ld(pcfd_ref), ld(tcfd_ref))

            # Class BCE: stream channel by channel, sum over C, mask-multiply once.
            cls_sum = jnp.zeros((CHUNK, LANES), f32)
            for ci in range(C):
                cls_sum += _bce_binary(clsp_ref[ci, sl, :].astype(f32),
                                       clst_ref[ci, sl, :].astype(f32))

            terms = (obj * d2, obj * bce_cfd, nob * bce_cfd,
                     obj * cls_sum, obj, nob)

            if needs_mask:
                rows = (base_row + r0
                        + lax.broadcasted_iota(jnp.int32, (CHUNK, 1), 0))
                valid = rows < m0
                # where() (not multiply) so NaN/Inf garbage in padded rows is dropped.
                terms = tuple(jnp.where(valid, t, 0.0) for t in terms)

            # Fold each (CHUNK, 128) term into the (8, 128) register accumulators
            # with pure VPU adds (no cross-lane reduction, no stacked temporaries).
            for k in range(NUM_ACC):
                accs[k] = accs[k] + jnp.sum(
                    terms[k].reshape(CHUNK // 8, 8, LANES), axis=0)

        # Accumulate directly into the resident output block, one slot at a time.
        for k in range(NUM_ACC):
            out_ref[0, k] += accs[k]

    # Clamp block index so a possible ghost block (num_cores * bpc > nsteps) stays
    # in-bounds; its contribution is zeroed by the in-kernel row mask.
    def row_map(c, i):
        return (jnp.minimum(c * bpc + i, nsteps - 1), 0)

    def cls_map(c, i):
        return (0, jnp.minimum(c * bpc + i, nsteps - 1), 0)

    inputs = [as_rows(a) for a in per_loc] + [cls_rows(predcls), cls_rows(tcls)]
    in_specs = ([pl.BlockSpec((tm, LANES), row_map) for _ in range(12)]
                + [pl.BlockSpec((C, tm, LANES), cls_map),
                   pl.BlockSpec((C, tm, LANES), cls_map)])

    partials = pl.pallas_call(
        kernel,
        out_shape=jax.ShapeDtypeStruct((num_cores, NUM_ACC, 8, LANES), jnp.float32),
        grid=(num_cores, bpc),
        in_specs=in_specs,
        out_specs=pl.BlockSpec((1, NUM_ACC, 8, LANES), lambda c, i: (c, 0, 0, 0)),
        compiler_params=pltpu.CompilerParams(
            dimension_semantics=("parallel", "arbitrary"),
            vmem_limit_bytes=int(vmem_limit_bytes)),
    )(*inputs)

    # ---- global finalize (counts summed over ALL tiles / cores) ----
    sums = jnp.sum(partials, axis=(0, 2, 3))            # (6,)
    sum_coord, sum_cfd_obj, sum_cfd_nob = sums[0], sums[1], sums[2]
    sum_cls, n_obj, n_nob = sums[3], sums[4], sums[5]
    # Guard empty masks (PyTorch would give NaN on an empty mean; we return 0
    # contribution instead).
    inv_obj = 1.0 / jnp.maximum(n_obj, 1.0)
    inv_nob = 1.0 / jnp.maximum(n_nob, 1.0)
    loss = ((sum_coord + float(objscl) * sum_cfd_obj + sum_cls / C) * inv_obj
            + float(nobscl) * sum_cfd_nob * inv_nob)
    return loss


if __name__ == "__main__":
    # Small YOLO-ish head: batch=2, anchors=3, grid 32x32, 4 classes.
    # N = 6144 is 128-aligned (free reshape path); tile_rows=32 forces a multi-step
    # reduction with a partial last block so the in-kernel mask path is exercised.
    B, A, H, W, C = 2, 3, 32, 32, 4
    N = B * A * H * W

    key = jax.random.PRNGKey(0)
    keys = jax.random.split(key, 16)

    def unit(k, shape):
        return jax.nn.sigmoid(jax.random.normal(k, shape, jnp.float32))

    # Predictions (box offsets raw f32, confidences/classes in (0,1)).
    x = jax.random.normal(keys[0], (N, 1), jnp.float32)
    y = jax.random.normal(keys[1], (N, 1), jnp.float32)
    w = jax.random.normal(keys[2], (N, 1), jnp.float32)
    h = jax.random.normal(keys[3], (N, 1), jnp.float32)
    predcfd = unit(keys[4], (N, 1))
    predcls = unit(keys[5], (N, C))

    # Targets: soft box targets in f32; binary cfd/cls targets in bf16 (exact 0/1)
    # to demonstrate dtype narrowing of the HBM stream without numeric change.
    tx = unit(keys[6], (N, 1))
    ty = unit(keys[7], (N, 1))
    tw = jax.random.normal(keys[8], (N, 1), jnp.float32)
    th = jax.random.normal(keys[9], (N, 1), jnp.float32)
    tcfd = (jax.random.uniform(keys[10], (N, 1)) > 0.5).astype(jnp.bfloat16)
    tcls = (jax.random.uniform(keys[11], (N, C)) > 0.5).astype(jnp.bfloat16)

    # Masks: objmask sparse, nobmask = ~objmask; guarantee both non-empty (bf16).
    obj_bool = jax.random.uniform(keys[12], (N, 1)) < 0.1
    obj_bool = obj_bool.at[0, 0].set(True)
    obj_bool = obj_bool.at[1, 0].set(False)
    objmask = obj_bool.astype(jnp.bfloat16)
    nobmask = (~obj_bool).astype(jnp.bfloat16)

    OBJSCL, NOBSCL = 1, 100
    loss = l1smooth_loss(x, y, w, h, predcfd, predcls,
                         tx, ty, tw, th, tcfd, tcls,
                         objmask, nobmask, objscl=OBJSCL, nobscl=NOBSCL,
                         tile_rows=32)
    jax.block_until_ready(loss)

    # ---- pure-JAX reference (matches the PyTorch module semantics) ----
    obj_b = obj_bool.reshape(-1)
    nob_b = ~obj_b
    tcfd32 = tcfd.astype(jnp.float32)
    tcls32 = tcls.astype(jnp.float32)

    def ref_bce(p, t):
        logp = jnp.maximum(jnp.log(p), -100.0)
        log1 = jnp.maximum(jnp.log(1.0 - p), -100.0)
        return -(t * logp + (1.0 - t) * log1)

    def ref_mse(p, t):
        pf, tf = p.reshape(-1), t.reshape(-1)
        return jnp.mean((pf[obj_b] - tf[obj_b]) ** 2)

    lossx = ref_mse(x, tx)
    lossy = ref_mse(y, ty)
    lossw = ref_mse(w, tw)
    lossh = ref_mse(h, th)
    bce_cfd = ref_bce(predcfd.reshape(-1), tcfd32.reshape(-1))
    losscfdobj = jnp.mean(bce_cfd[obj_b])
    losscfdnob = jnp.mean(bce_cfd[nob_b])
    losscls = jnp.mean(ref_bce(predcls, tcls32)[obj_b])
    loss_ref = (lossx + lossy + lossw + lossh
                + OBJSCL * losscfdobj + NOBSCL * losscfdnob + losscls)

    assert jnp.isfinite(loss), loss
    assert jnp.allclose(loss, loss_ref, rtol=1e-4, atol=1e-3), (loss, loss_ref)
    print("KERNEL_OK")
</pallas_src>

<mosaic_0001>
module attributes {stable_mosaic.version = 11 : i64} {
  func.func @kernel(%arg0: i32, %arg1: i32, %arg2: memref<32x128xf32, #tpu.memory_space<vmem>>, %arg3: memref<32x128xf32, #tpu.memory_space<vmem>>, %arg4: memref<32x128xf32, #tpu.memory_space<vmem>>, %arg5: memref<32x128xf32, #tpu.memory_space<vmem>>, %arg6: memref<32x128xf32, #tpu.memory_space<vmem>>, %arg7: memref<32x128xf32, #tpu.memory_space<vmem>>, %arg8: memref<32x128xf32, #tpu.memory_space<vmem>>, %arg9: memref<32x128xf32, #tpu.memory_space<vmem>>, %arg10: memref<32x128xf32, #tpu.memory_space<vmem>>, %arg11: memref<32x128xbf16, #tpu.memory_space<vmem>>, %arg12: memref<32x128xbf16, #tpu.memory_space<vmem>>, %arg13: memref<32x128xbf16, #tpu.memory_space<vmem>>, %arg14: memref<4x32x128xf32, #tpu.memory_space<vmem>>, %arg15: memref<4x32x128xbf16, #tpu.memory_space<vmem>>, %arg16: memref<1x6x8x128xf32, #tpu.memory_space<vmem>>) attributes {dimension_semantics = [#tpu.dimension_semantics<parallel>, #tpu.dimension_semantics<arbitrary>], iteration_bounds = array<i64: 1, 2>, scalar_prefetch = 0 : i64, scratch_operands = 0 : i64, tpu.core_type = #tpu.core_type<tc>, window_params = [{transform_indices = @transform_0, window_bounds = array<i64: 32, 128>}, {transform_indices = @transform_1, window_bounds = array<i64: 32, 128>}, {transform_indices = @transform_2, window_bounds = array<i64: 32, 128>}, {transform_indices = @transform_3, window_bounds = array<i64: 32, 128>}, {transform_indices = @transform_4, window_bounds = array<i64: 32, 128>}, {transform_indices = @transform_5, window_bounds = array<i64: 32, 128>}, {transform_indices = @transform_6, window_bounds = array<i64: 32, 128>}, {transform_indices = @transform_7, window_bounds = array<i64: 32, 128>}, {transform_indices = @transform_8, window_bounds = array<i64: 32, 128>}, {transform_indices = @transform_9, window_bounds = array<i64: 32, 128>}, {transform_indices = @transform_10, window_bounds = array<i64: 32, 128>}, {transform_indices = @transform_11, window_bounds = array<i64: 32, 128>}, {transform_indices = @transform_12, window_bounds = array<i64: 4, 32, 128>}, {transform_indices = @transform_13, window_bounds = array<i64: 4, 32, 128>}, {transform_indices = @transform_14, window_bounds = array<i64: 1, 6, 8, 128>}]} {
    %c0_i32 = arith.constant 0 : i32
    %0 = arith.cmpi eq, %arg1, %c0_i32 : i32
    %1 = arith.extui %0 : i1 to i32
    %c0_i32_0 = arith.constant 0 : i32
    %2 = arith.cmpi ne, %1, %c0_i32_0 : i32
    scf.if %2 {
      %cst_130 = arith.constant 0.000000e+00 : f32
      %211 = vector.broadcast %cst_130 : f32 to vector<1x6x8x128xf32>
      %c0_131 = arith.constant 0 : index
      %c0_132 = arith.constant 0 : index
      %c0_133 = arith.constant 0 : index
      %c0_134 = arith.constant 0 : index
      %212 = vector.load %arg16[%c0_131, %c0_132, %c0_133, %c0_134] : memref<1x6x8x128xf32, #tpu.memory_space<vmem>>, vector<1x6x8x128xf32>
      tpu.vector_store %arg16[%c0_131, %c0_132, %c0_133, %c0_134], %211 {strides = array<i32>} : memref<1x6x8x128xf32, #tpu.memory_space<vmem>>, vector<1x6x8x128xf32>,
    } else {
    }
    %c2_i32 = arith.constant 2 : i32
    %3 = arith.muli %arg0, %c2_i32 : i32
    %4 = arith.addi %3, %arg1 : i32
    %c32_i32 = arith.constant 32 : i32
    %5 = arith.muli %4, %c32_i32 : i32
    %cst = arith.constant 0.000000e+00 : f32
    %6 = vector.broadcast %cst : f32 to vector<8x128xf32>
    %cst_1 = arith.constant 0.000000e+00 : f32
    %7 = vector.broadcast %cst_1 : f32 to vector<8x128xf32>
    %cst_2 = arith.constant 0.000000e+00 : f32
    %8 = vector.broadcast %cst_2 : f32 to vector<8x128xf32>
    %cst_3 = arith.constant 0.000000e+00 : f32
    %9 = vector.broadcast %cst_3 : f32 to vector<8x128xf32>
    %cst_4 = arith.constant 0.000000e+00 : f32
    %10 = vector.broadcast %cst_4 : f32 to vector<8x128xf32>
    %cst_5 = arith.constant 0.000000e+00 : f32
    %11 = vector.broadcast %cst_5 : f32 to vector<8x128xf32>
    %c0 = arith.constant 0 : index
    %c0_6 = arith.constant 0 : index
    %12 = vector.load %arg12[%c0, %c0_6] : memref<32x128xbf16, #tpu.memory_space<vmem>>, vector<32x128xbf16>
    %13 = arith.extf %12 : vector<32x128xbf16> to vector<32x128xf32>
    %c0_7 = arith.constant 0 : index
    %c0_8 = arith.constant 0 : index
    %14 = vector.load %arg13[%c0_7, %c0_8] : memref<32x128xbf16, #tpu.memory_space<vmem>>, vector<32x128xbf16>
    %15 = arith.extf %14 : vector<32x128xbf16> to vector<32x128xf32>
    %c0_9 = arith.constant 0 : index
    %c0_10 = arith.constant 0 : index
    %16 = vector.load %arg2[%c0_9, %c0_10] : memref<32x128xf32, #tpu.memory_space<vmem>>, vector<32x128xf32>
    %c0_11 = arith.constant 0 : index
    %c0_12 = arith.constant 0 : index
    %17 = vector.load %arg7[%c0_11, %c0_12] : memref<32x128xf32, #tpu.memory_space<vmem>>, vector<32x128xf32>
    %18 = arith.subf %16, %17 : vector<32x128xf32>
    %19 = arith.mulf %18, %18 : vector<32x128xf32>
    %c0_13 = arith.constant 0 : index
    %c0_14 = arith.constant 0 : index
    %20 = vector.load %arg3[%c0_13, %c0_14] : memref<32x128xf32, #tpu.memory_space<vmem>>, vector<32x128xf32>
    %c0_15 = arith.constant 0 : index
    %c0_16 = arith.constant 0 : index
    %21 = vector.load %arg8[%c0_15, %c0_16] : memref<32x128xf32, #tpu.memory_space<vmem>>, vector<32x128xf32>
    %22 = arith.subf %20, %21 : vector<32x128xf32>
    %23 = arith.mulf %22, %22 : vector<32x128xf32>
    %24 = arith.addf %19, %23 : vector<32x128xf32>
    %c0_17 = arith.constant 0 : index
    %c0_18 = arith.constant 0 : index
    %25 = vector.load %arg4[%c0_17, %c0_18] : memref<32x128xf32, #tpu.memory_space<vmem>>, vector<32x128xf32>
    %c0_19 = arith.constant 0 : index
    %c0_20 = arith.constant 0 : index
    %26 = vector.load %arg9[%c0_19, %c0_20] : memref<32x128xf32, #tpu.memory_space<vmem>>, vector<32x128xf32>
    %27 = arith.subf %25, %26 : vector<32x128xf32>
    %28 = arith.mulf %27, %27 : vector<32x128xf32>
    %29 = arith.addf %24, %28 : vector<32x128xf32>
    %c0_21 = arith.constant 0 : index
    %c0_22 = arith.constant 0 : index
    %30 = vector.load %arg5[%c0_21, %c0_22] : memref<32x128xf32, #tpu.memory_space<vmem>>, vector<32x128xf32>
    %c0_23 = arith.constant 0 : index
    %c0_24 = arith.constant 0 : index
    %31 = vector.load %arg10[%c0_23, %c0_24] : memref<32x128xf32, #tpu.memory_space<vmem>>, vector<32x128xf32>
    %32 = arith.subf %30, %31 : vector<32x128xf32>
    %33 = arith.mulf %32, %32 : vector<32x128xf32>
    %34 = arith.addf %29, %33 : vector<32x128xf32>
    %c0_25 = arith.constant 0 : index
    %c0_26 = arith.constant 0 : index
    %35 = vector.load %arg6[%c0_25, %c0_26] : memref<32x128xf32, #tpu.memory_space<vmem>>, vector<32x128xf32>
    %c0_27 = arith.constant 0 : index
    %c0_28 = arith.constant 0 : index
    %36 = vector.load %arg11[%c0_27, %c0_28] : memref<32x128xbf16, #tpu.memory_space<vmem>>, vector<32x128xbf16>
    %37 = arith.extf %36 : vector<32x128xbf16> to vector<32x128xf32>
    %38 = arith.mulf %37, %35 : vector<32x128xf32>
    %cst_29 = arith.constant 1.000000e+00 : f32
    %39 = vector.broadcast %cst_29 : f32 to vector<32x128xf32>
    %40 = arith.subf %39, %37 : vector<32x128xf32>
    %cst_30 = arith.constant 1.000000e+00 : f32
    %41 = vector.broadcast %cst_30 : f32 to vector<32x128xf32>
    %42 = arith.subf %41, %35 : vector<32x128xf32>
    %43 = arith.mulf %40, %42 : vector<32x128xf32>
    %44 = arith.addf %38, %43 : vector<32x128xf32>
    %45 = math.log %44 : vector<32x128xf32>
    %cst_31 = arith.constant -1.000000e+02 : f32
    %46 = vector.broadcast %cst_31 : f32 to vector<32x128xf32>
    %47 = arith.maximumf %45, %46 : vector<32x128xf32>
    %cst_32 = arith.constant 0.000000e+00 : f32
    %48 = vector.broadcast %cst_32 : f32 to vector<32x128xf32>
    %49 = arith.subf %48, %47 : vector<32x128xf32>
    %cst_33 = arith.constant 0.000000e+00 : f32
    %50 = vector.broadcast %cst_33 : f32 to vector<32x128xf32>
    %c0_34 = arith.constant 0 : index
    %c0_35 = arith.constant 0 : index
    %c0_36 = arith.constant 0 : index
    %51 = vector.load %arg14[%c0_34, %c0_35, %c0_36] : memref<4x32x128xf32, #tpu.memory_space<vmem>>, vector<1x32x128xf32>
    %52 = vector.shape_cast %51 : vector<1x32x128xf32> to vector<32x128xf32>
    %c0_37 = arith.constant 0 : index
    %c0_38 = arith.constant 0 : index
    %c0_39 = arith.constant 0 : index
    %53 = vector.load %arg15[%c0_37, %c0_38, %c0_39] : memref<4x32x128xbf16, #tpu.memory_space<vmem>>, vector<1x32x128xbf16>
    %54 = vector.shape_cast %53 : vector<1x32x128xbf16> to vector<32x128xbf16>
    %55 = arith.extf %54 : vector<32x128xbf16> to vector<32x128xf32>
    %56 = arith.mulf %55, %52 : vector<32x128xf32>
    %cst_40 = arith.constant 1.000000e+00 : f32
    %57 = vector.broadcast %cst_40 : f32 to vector<32x128xf32>
    %58 = arith.subf %57, %55 : vector<32x128xf32>
    %cst_41 = arith.constant 1.000000e+00 : f32
    %59 = vector.broadcast %cst_41 : f32 to vector<32x128xf32>
    %60 = arith.subf %59, %52 : vector<32x128xf32>
    %61 = arith.mulf %58, %60 : vector<32x128xf32>
    %62 = arith.addf %56, %61 : vector<32x128xf32>
    %63 = math.log %62 : vector<32x128xf32>
    %cst_42 = arith.constant -1.000000e+02 : f32
    %64 = vector.broadcast %cst_42 : f32 to vector<32x128xf32>
    %65 = arith.maximumf %63, %64 : vector<32x128xf32>
    %cst_43 = arith.constant 0.000000e+00 : f32
    %66 = vector.broadcast %cst_43 : f32 to vector<32x128xf32>
    %67 = arith.subf %66, %65 : vector<32x128xf32>
    %68 = arith.addf %50, %67 : vector<32x128xf32>
    %c1 = arith.constant 1 : index
    %c0_44 = arith.constant 0 : index
    %c0_45 = arith.constant 0 : index
    %69 = vector.load %arg14[%c1, %c0_44, %c0_45] : memref<4x32x128xf32, #tpu.memory_space<vmem>>, vector<1x32x128xf32>
    %70 = vector.shape_cast %69 : vector<1x32x128xf32> to vector<32x128xf32>
    %c1_46 = arith.constant 1 : index
    %c0_47 = arith.constant 0 : index
    %c0_48 = arith.constant 0 : index
    %71 = vector.load %arg15[%c1_46, %c0_47, %c0_48] : memref<4x32x128xbf16, #tpu.memory_space<vmem>>, vector<1x32x128xbf16>
    %72 = vector.shape_cast %71 : vector<1x32x128xbf16> to vector<32x128xbf16>
    %73 = arith.extf %72 : vector<32x128xbf16> to vector<32x128xf32>
    %74 = arith.mulf %73, %70 : vector<32x128xf32>
    %cst_49 = arith.constant 1.000000e+00 : f32
    %75 = vector.broadcast %cst_49 : f32 to vector<32x128xf32>
    %76 = arith.subf %75, %73 : vector<32x128xf32>
    %cst_50 = arith.constant 1.000000e+00 : f32
    %77 = vector.broadcast %cst_50 : f32 to vector<32x128xf32>
    %78 = arith.subf %77, %70 : vector<32x128xf32>
    %79 = arith.mulf %76, %78 : vector<32x128xf32>
    %80 = arith.addf %74, %79 : vector<32x128xf32>
    %81 = math.log %80 : vector<32x128xf32>
    %cst_51 = arith.constant -1.000000e+02 : f32
    %82 = vector.broadcast %cst_51 : f32 to vector<32x128xf32>
    %83 = arith.maximumf %81, %82 : vector<32x128xf32>
    %cst_52 = arith.constant 0.000000e+00 : f32
    %84 = vector.broadcast %cst_52 : f32 to vector<32x128xf32>
    %85 = arith.subf %84, %83 : vector<32x128xf32>
    %86 = arith.addf %68, %85 : vector<32x128xf32>
    %c2 = arith.constant 2 : index
    %c0_53 = arith.constant 0 : index
    %c0_54 = arith.constant 0 : index
    %87 = vector.load %arg14[%c2, %c0_53, %c0_54] : memref<4x32x128xf32, #tpu.memory_space<vmem>>, vector<1x32x128xf32>
    %88 = vector.shape_cast %87 : vector<1x32x128xf32> to vector<32x128xf32>
    %c2_55 = arith.constant 2 : index
    %c0_56 = arith.constant 0 : index
    %c0_57 = arith.constant 0 : index
    %89 = vector.load %arg15[%c2_55, %c0_56, %c0_57] : memref<4x32x128xbf16, #tpu.memory_space<vmem>>, vector<1x32x128xbf16>
    %90 = vector.shape_cast %89 : vector<1x32x128xbf16> to vector<32x128xbf16>
    %91 = arith.extf %90 : vector<32x128xbf16> to vector<32x128xf32>
    %92 = arith.mulf %91, %88 : vector<32x128xf32>
    %cst_58 = arith.constant 1.000000e+00 : f32
    %93 = vector.broadcast %cst_58 : f32 to vector<32x128xf32>
    %94 = arith.subf %93, %91 : vector<32x128xf32>
    %cst_59 = arith.constant 1.000000e+00 : f32
    %95 = vector.broadcast %cst_59 : f32 to vector<32x128xf32>
    %96 = arith.subf %95, %88 : vector<32x128xf32>
    %97 = arith.mulf %94, %96 : vector<32x128xf32>
    %98 = arith.addf %92, %97 : vector<32x128xf32>
    %99 = math.log %98 : vector<32x128xf32>
    %cst_60 = arith.constant -1.000000e+02 : f32
    %100 = vector.broadcast %cst_60 : f32 to vector<32x128xf32>
    %101 = arith.maximumf %99, %100 : vector<32x128xf32>
    %cst_61 = arith.constant 0.000000e+00 : f32
    %102 = vector.broadcast %cst_61 : f32 to vector<32x128xf32>
    %103 = arith.subf %102, %101 : vector<32x128xf32>
    %104 = arith.addf %86, %103 : vector<32x128xf32>
    %c3 = arith.constant 3 : index
    %c0_62 = arith.constant 0 : index
    %c0_63 = arith.constant 0 : index
    %105 = vector.load %arg14[%c3, %c0_62, %c0_63] : memref<4x32x128xf32, #tpu.memory_space<vmem>>, vector<1x32x128xf32>
    %106 = vector.shape_cast %105 : vector<1x32x128xf32> to vector<32x128xf32>
    %c3_64 = arith.constant 3 : index
    %c0_65 = arith.constant 0 : index
    %c0_66 = arith.constant 0 : index
    %107 = vector.load %arg15[%c3_64, %c0_65, %c0_66] : memref<4x32x128xbf16, #tpu.memory_space<vmem>>, vector<1x32x128xbf16>
    %108 = vector.shape_cast %107 : vector<1x32x128xbf16> to vector<32x128xbf16>
    %109 = arith.extf %108 : vector<32x128xbf16> to vector<32x128xf32>
    %110 = arith.mulf %109, %106 : vector<32x128xf32>
    %cst_67 = arith.constant 1.000000e+00 : f32
    %111 = vector.broadcast %cst_67 : f32 to vector<32x128xf32>
    %112 = arith.subf %111, %109 : vector<32x128xf32>
    %cst_68 = arith.constant 1.000000e+00 : f32
    %113 = vector.broadcast %cst_68 : f32 to vector<32x128xf32>
    %114 = arith.subf %113, %106 : vector<32x128xf32>
    %115 = arith.mulf %112, %114 : vector<32x128xf32>
    %116 = arith.addf %110, %115 : vector<32x128xf32>
    %117 = math.log %116 : vector<32x128xf32>
    %cst_69 = arith.constant -1.000000e+02 : f32
    %118 = vector.broadcast %cst_69 : f32 to vector<32x128xf32>
    %119 = arith.maximumf %117, %118 : vector<32x128xf32>
    %cst_70 = arith.constant 0.000000e+00 : f32
    %120 = vector.broadcast %cst_70 : f32 to vector<32x128xf32>
    %121 = arith.subf %120, %119 : vector<32x128xf32>
    %122 = arith.addf %104, %121 : vector<32x128xf32>
    %123 = arith.mulf %13, %34 : vector<32x128xf32>
    %124 = arith.mulf %13, %49 : vector<32x128xf32>
    %125 = arith.mulf %15, %49 : vector<32x128xf32>
    %126 = arith.mulf %13, %122 : vector<32x128xf32>
    %c0_i32_71 = arith.constant 0 : i32
    %127 = arith.addi %5, %c0_i32_71 : i32
    %128 = tpu.iota {dimensions = array<i32: 0>} : vector<32x1xi32>
    %129 = vector.broadcast %127 : i32 to vector<32x1xi32>
    %130 = arith.addi %129, %128 : vector<32x1xi32>
    %c48_i32 = arith.constant 48 : i32
    %131 = vector.broadcast %c48_i32 : i32 to vector<32x1xi32>
    %132 = arith.cmpi slt, %130, %131 : vector<32x1xi32>
    %cst_72 = arith.constant 0.000000e+00 : f32
    %133 = vector.shape_cast %132 : vector<32x1xi1> to vector<32x1xi1>
    %134 = vector.broadcast %133 : vector<32x1xi1> to vector<32x128xi1>
    %135 = vector.broadcast %cst_72 : f32 to vector<32x128xf32>
    %136 = arith.select %134, %123, %135 : vector<32x128xi1>, vector<32x128xf32>
    %cst_73 = arith.constant 0.000000e+00 : f32
    %137 = vector.shape_cast %132 : vector<32x1xi1> to vector<32x1xi1>
    %138 = vector.broadcast %137 : vector<32x1xi1> to vector<32x128xi1>
    %139 = vector.broadcast %cst_73 : f32 to vector<32x128xf32>
    %140 = arith.select %138, %124, %139 : vector<32x128xi1>, vector<32x128xf32>
    %cst_74 = arith.constant 0.000000e+00 : f32
    %141 = vector.shape_cast %132 : vector<32x1xi1> to vector<32x1xi1>
    %142 = vector.broadcast %141 : vector<32x1xi1> to vector<32x128xi1>
    %143 = vector.broadcast %cst_74 : f32 to vector<32x128xf32>
    %144 = arith.select %142, %125, %143 : vector<32x128xi1>, vector<32x128xf32>
    %cst_75 = arith.constant 0.000000e+00 : f32
    %145 = vector.shape_cast %132 : vector<32x1xi1> to vector<32x1xi1>
    %146 = vector.broadcast %145 : vector<32x1xi1> to vector<32x128xi1>
    %147 = vector.broadcast %cst_75 : f32 to vector<32x128xf32>
    %148 = arith.select %146, %126, %147 : vector<32x128xi1>, vector<32x128xf32>
    %cst_76 = arith.constant 0.000000e+00 : f32
    %149 = vector.shape_cast %132 : vector<32x1xi1> to vector<32x1xi1>
    %150 = vector.broadcast %149 : vector<32x1xi1> to vector<32x128xi1>
    %151 = vector.broadcast %cst_76 : f32 to vector<32x128xf32>
    %152 = arith.select %150, %13, %151 : vector<32x128xi1>, vector<32x128xf32>
    %cst_77 = arith.constant 0.000000e+00 : f32
    %153 = vector.shape_cast %132 : vector<32x1xi1> to vector<32x1xi1>
    %154 = vector.broadcast %153 : vector<32x1xi1> to vector<32x128xi1>
    %155 = vector.broadcast %cst_77 : f32 to vector<32x128xf32>
    %156 = arith.select %154, %15, %155 : vector<32x128xi1>, vector<32x128xf32>
    %157 = vector.shape_cast %136 : vector<32x128xf32> to vector<4x8x128xf32>
    %cst_78 = arith.constant dense<0.000000e+00> : vector<8x128xf32>
    %158 = vector.multi_reduction <add>, %157, %cst_78 [0] : vector<4x8x128xf32> to vector<8x128xf32>
    %159 = arith.addf %6, %158 : vector<8x128xf32>
    %160 = vector.shape_cast %140 : vector<32x128xf32> to vector<4x8x128xf32>
    %cst_79 = arith.constant dense<0.000000e+00> : vector<8x128xf32>
    %161 = vector.multi_reduction <add>, %160, %cst_79 [0] : vector<4x8x128xf32> to vector<8x128xf32>
    %162 = arith.addf %7, %161 : vector<8x128xf32>
    %163 = vector.shape_cast %144 : vector<32x128xf32> to vector<4x8x128xf32>
    %cst_80 = arith.constant dense<0.000000e+00> : vector<8x128xf32>
    %164 = vector.multi_reduction <add>, %163, %cst_80 [0] : vector<4x8x128xf32> to vector<8x128xf32>
    %165 = arith.addf %8, %164 : vector<8x128xf32>
    %166 = vector.shape_cast %148 : vector<32x128xf32> to vector<4x8x128xf32>
    %cst_81 = arith.constant dense<0.000000e+00> : vector<8x128xf32>
    %167 = vector.multi_reduction <add>, %166, %cst_81 [0] : vector<4x8x128xf32> to vector<8x128xf32>
    %168 = arith.addf %9, %167 : vector<8x128xf32>
    %169 = vector.shape_cast %152 : vector<32x128xf32> to vector<4x8x128xf32>
    %cst_82 = arith.constant dense<0.000000e+00> : vector<8x128xf32>
    %170 = vector.multi_reduction <add>, %169, %cst_82 [0] : vector<4x8x128xf32> to vector<8x128xf32>
    %171 = arith.addf %10, %170 : vector<8x128xf32>
    %172 = vector.shape_cast %156 : vector<32x128xf32> to vector<4x8x128xf32>
    %cst_83 = arith.constant dense<0.000000e+00> : vector<8x128xf32>
    %173 = vector.multi_reduction <add>, %172, %cst_83 [0] : vector<4x8x128xf32> to vector<8x128xf32>
    %174 = arith.addf %11, %173 : vector<8x128xf32>
    %c0_84 = arith.constant 0 : index
    %c0_85 = arith.constant 0 : index
    %c0_86 = arith.constant 0 : index
    %c0_87 = arith.constant 0 : index
    %175 = vector.load %arg16[%c0_84, %c0_85, %c0_86, %c0_87] : memref<1x6x8x128xf32, #tpu.memory_space<vmem>>, vector<1x1x8x128xf32>
    %176 = vector.shape_cast %175 : vector<1x1x8x128xf32> to vector<8x128xf32>
    %177 = arith.addf %176, %159 : vector<8x128xf32>
    %c0_88 = arith.constant 0 : index
    %c0_89 = arith.constant 0 : index
    %c0_90 = arith.constant 0 : index
    %c0_91 = arith.constant 0 : index
    %178 = vector.load %arg16[%c0_88, %c0_89, %c0_90, %c0_91] : memref<1x6x8x128xf32, #tpu.memory_space<vmem>>, vector<1x1x8x128xf32>
    %179 = vector.shape_cast %178 : vector<1x1x8x128xf32> to vector<8x128xf32>
    %180 = vector.shape_cast %177 : vector<8x128xf32> to vector<1x1x8x128xf32>
    tpu.vector_store %arg16[%c0_88, %c0_89, %c0_90, %c0_91], %180 {strides = array<i32>} : memref<1x6x8x128xf32, #tpu.memory_space<vmem>>, vector<1x1x8x128xf32>,
    %c0_92 = arith.constant 0 : index
    %c1_93 = arith.constant 1 : index
    %c0_94 = arith.constant 0 : index
    %c0_95 = arith.constant 0 : index
    %181 = vector.load %arg16[%c0_92, %c1_93, %c0_94, %c0_95] : memref<1x6x8x128xf32, #tpu.memory_space<vmem>>, vector<1x1x8x128xf32>
    %182 = vector.shape_cast %181 : vector<1x1x8x128xf32> to vector<8x128xf32>
    %183 = arith.addf %182, %162 : vector<8x128xf32>
    %c0_96 = arith.constant 0 : index
    %c1_97 = arith.constant 1 : index
    %c0_98 = arith.constant 0 : index
    %c0_99 = arith.constant 0 : index
    %184 = vector.load %arg16[%c0_96, %c1_97, %c0_98, %c0_99] : memref<1x6x8x128xf32, #tpu.memory_space<vmem>>, vector<1x1x8x128xf32>
    %185 = vector.shape_cast %184 : vector<1x1x8x128xf32> to vector<8x128xf32>
    %186 = vector.shape_cast %183 : vector<8x128xf32> to vector<1x1x8x128xf32>
    tpu.vector_store %arg16[%c0_96, %c1_97, %c0_98, %c0_99], %186 {strides = array<i32>} : memref<1x6x8x128xf32, #tpu.memory_space<vmem>>, vector<1x1x8x128xf32>,
    %c0_100 = arith.constant 0 : index
    %c2_101 = arith.constant 2 : index
    %c0_102 = arith.constant 0 : index
    %c0_103 = arith.constant 0 : index
    %187 = vector.load %arg16[%c0_100, %c2_101, %c0_102, %c0_103] : memref<1x6x8x128xf32, #tpu.memory_space<vmem>>, vector<1x1x8x128xf32>
    %188 = vector.shape_cast %187 : vector<1x1x8x128xf32> to vector<8x128xf32>
    %189 = arith.addf %188, %165 : vector<8x128xf32>
    %c0_104 = arith.constant 0 : index
    %c2_105 = arith.constant 2 : index
    %c0_106 = arith.constant 0 : index
    %c0_107 = arith.constant 0 : index
    %190 = vector.load %arg16[%c0_104, %c2_105, %c0_106, %c0_107] : memref<1x6x8x128xf32, #tpu.memory_space<vmem>>, vector<1x1x8x128xf32>
    %191 = vector.shape_cast %190 : vector<1x1x8x128xf32> to vector<8x128xf32>
    %192 = vector.shape_cast %189 : vector<8x128xf32> to vector<1x1x8x128xf32>
    tpu.vector_store %arg16[%c0_104, %c2_105, %c0_106, %c0_107], %192 {strides = array<i32>} : memref<1x6x8x128xf32, #tpu.memory_space<vmem>>, vector<1x1x8x128xf32>,
    %c0_108 = arith.constant 0 : index
    %c3_109 = arith.constant 3 : index
    %c0_110 = arith.constant 0 : index
    %c0_111 = arith.constant 0 : index
    %193 = vector.load %arg16[%c0_108, %c3_109, %c0_110, %c0_111] : memref<1x6x8x128xf32, #tpu.memory_space<vmem>>, vector<1x1x8x128xf32>
    %194 = vector.shape_cast %193 : vector<1x1x8x128xf32> to vector<8x128xf32>
    %195 = arith.addf %194, %168 : vector<8x128xf32>
    %c0_112 = arith.constant 0 : index
    %c3_113 = arith.constant 3 : index
    %c0_114 = arith.constant 0 : index
    %c0_115 = arith.constant 0 : index
    %196 = vector.load %arg16[%c0_112, %c3_113, %c0_114, %c0_115] : memref<1x6x8x128xf32, #tpu.memory_space<vmem>>, vector<1x1x8x128xf32>
    %197 = vector.shape_cast %196 : vector<1x1x8x128xf32> to vector<8x128xf32>
    %198 = vector.shape_cast %195 : vector<8x128xf32> to vector<1x1x8x128xf32>
    tpu.vector_store %arg16[%c0_112, %c3_113, %c0_114, %c0_115], %198 {strides = array<i32>} : memref<1x6x8x128xf32, #tpu.memory_space<vmem>>, vector<1x1x8x128xf32>,
    %c0_116 = arith.constant 0 : index
    %c4 = arith.constant 4 : index
    %c0_117 = arith.constant 0 : index
    %c0_118 = arith.constant 0 : index
    %199 = vector.load %arg16[%c0_116, %c4, %c0_117, %c0_118] : memref<1x6x8x128xf32, #tpu.memory_space<vmem>>, vector<1x1x8x128xf32>
    %200 = vector.shape_cast %199 : vector<1x1x8x128xf32> to vector<8x128xf32>
    %201 = arith.addf %200, %171 : vector<8x128xf32>
    %c0_119 = arith.constant 0 : index
    %c4_120 = arith.constant 4 : index
    %c0_121 = arith.constant 0 : index
    %c0_122 = arith.constant 0 : index
    %202 = vector.load %arg16[%c0_119, %c4_120, %c0_121, %c0_122] : memref<1x6x8x128xf32, #tpu.memory_space<vmem>>, vector<1x1x8x128xf32>
    %203 = vector.shape_cast %202 : vector<1x1x8x128xf32> to vector<8x128xf32>
    %204 = vector.shape_cast %201 : vector<8x128xf32> to vector<1x1x8x128xf32>
    tpu.vector_store %arg16[%c0_119, %c4_120, %c0_121, %c0_122], %204 {strides = array<i32>} : memref<1x6x8x128xf32, #tpu.memory_space<vmem>>, vector<1x1x8x128xf32>,
    %c0_123 = arith.constant 0 : index
    %c5 = arith.constant 5 : index
    %c0_124 = arith.constant 0 : index
    %c0_125 = arith.constant 0 : index
    %205 = vector.load %arg16[%c0_123, %c5, %c0_124, %c0_125] : memref<1x6x8x128xf32, #tpu.memory_space<vmem>>, vector<1x1x8x128xf32>
    %206 = vector.shape_cast %205 : vector<1x1x8x128xf32> to vector<8x128xf32>
    %207 = arith.addf %206, %174 : vector<8x128xf32>
    %c0_126 = arith.constant 0 : index
    %c5_127 = arith.constant 5 : index
    %c0_128 = arith.constant 0 : index
    %c0_129 = arith.constant 0 : index
    %208 = vector.load %arg16[%c0_126, %c5_127, %c0_128, %c0_129] : memref<1x6x8x128xf32, #tpu.memory_space<vmem>>, vector<1x1x8x128xf32>
    %209 = vector.shape_cast %208 : vector<1x1x8x128xf32> to vector<8x128xf32>
    %210 = vector.shape_cast %207 : vector<8x128xf32> to vector<1x1x8x128xf32>
    tpu.vector_store %arg16[%c0_126, %c5_127, %c0_128, %c0_129], %210 {strides = array<i32>} : memref<1x6x8x128xf32, #tpu.memory_space<vmem>>, vector<1x1x8x128xf32>,
    return
  }
  func.func @transform_0(%arg0: i32, %arg1: i32) -> (i32, i32) {
    %c2_i32 = arith.constant 2 : i32
    %0 = arith.muli %arg0, %c2_i32 : i32
    %1 = arith.addi %0, %arg1 : i32
    %c1_i32 = arith.constant 1 : i32
    %2 = arith.minsi %1, %c1_i32 : i32
    %c0_i32 = arith.constant 0 : i32
    %c0_i32_0 = arith.constant 0 : i32
    return %2, %c0_i32 : i32, i32
  }
  func.func @transform_1(%arg0: i32, %arg1: i32) -> (i32, i32) {
    %c2_i32 = arith.constant 2 : i32
    %0 = arith.muli %arg0, %c2_i32 : i32
    %1 = arith.addi %0, %arg1 : i32
    %c1_i32 = arith.constant 1 : i32
    %2 = arith.minsi %1, %c1_i32 : i32
    %c0_i32 = arith.constant 0 : i32
    %c0_i32_0 = arith.constant 0 : i32
    return %2, %c0_i32 : i32, i32
  }
  func.func @transform_2(%arg0: i32, %arg1: i32) -> (i32, i32) {
    %c2_i32 = arith.constant 2 : i32
    %0 = arith.muli %arg0, %c2_i32 : i32
    %1 = arith.addi %0, %arg1 : i32
    %c1_i32 = arith.constant 1 : i32
    %2 = arith.minsi %1, %c1_i32 : i32
    %c0_i32 = arith.constant 0 : i32
    %c0_i32_0 = arith.constant 0 : i32
    return %2, %c0_i32 : i32, i32
  }
  func.func @transform_3(%arg0: i32, %arg1: i32) -> (i32, i32) {
    %c2_i32 = arith.constant 2 : i32
    %0 = arith.muli %arg0, %c2_i32 : i32
    %1 = arith.addi %0, %arg1 : i32
    %c1_i32 = arith.constant 1 : i32
    %2 = arith.minsi %1, %c1_i32 : i32
    %c0_i32 = arith.constant 0 : i32
    %c0_i32_0 = arith.constant 0 : i32
    return %2, %c0_i32 : i32, i32
  }
  func.func @transform_4(%arg0: i32, %arg1: i32) -> (i32, i32) {
    %c2_i32 = arith.constant 2 : i32
    %0 = arith.muli %arg0, %c2_i32 : i32
    %1 = arith.addi %0, %arg1 : i32
    %c1_i32 = arith.constant 1 : i32
    %2 = arith.minsi %1, %c1_i32 : i32
    %c0_i32 = arith.constant 0 : i32
    %c0_i32_0 = arith.constant 0 : i32
    return %2, %c0_i32 : i32, i32
  }
  func.func @transform_5(%arg0: i32, %arg1: i32) -> (i32, i32) {
    %c2_i32 = arith.constant 2 : i32
    %0 = arith.muli %arg0, %c2_i32 : i32
    %1 = arith.addi %0, %arg1 : i32
    %c1_i32 = arith.constant 1 : i32
    %2 = arith.minsi %1, %c1_i32 : i32
    %c0_i32 = arith.constant 0 : i32
    %c0_i32_0 = arith.constant 0 : i32
    return %2, %c0_i32 : i32, i32
  }
  func.func @transform_6(%arg0: i32, %arg1: i32) -> (i32, i32) {
    %c2_i32 = arith.constant 2 : i32
    %0 = arith.muli %arg0, %c2_i32 : i32
    %1 = arith.addi %0, %arg1 : i32
    %c1_i32 = arith.constant 1 : i32
    %2 = arith.minsi %1, %c1_i32 : i32
    %c0_i32 = arith.constant 0 : i32
    %c0_i32_0 = arith.constant 0 : i32
    return %2, %c0_i32 : i32, i32
  }
  func.func @transform_7(%arg0: i32, %arg1: i32) -> (i32, i32) {
    %c2_i32 = arith.constant 2 : i32
    %0 = arith.muli %arg0, %c2_i32 : i32
    %1 = arith.addi %0, %arg1 : i32
    %c1_i32 = arith.constant 1 : i32
    %2 = arith.minsi %1, %c1_i32 : i32
    %c0_i32 = arith.constant 0 : i32
    %c0_i32_0 = arith.constant 0 : i32
    return %2, %c0_i32 : i32, i32
  }
  func.func @transform_8(%arg0: i32, %arg1: i32) -> (i32, i32) {
    %c2_i32 = arith.constant 2 : i32
    %0 = arith.muli %arg0, %c2_i32 : i32
    %1 = arith.addi %0, %arg1 : i32
    %c1_i32 = arith.constant 1 : i32
    %2 = arith.minsi %1, %c1_i32 : i32
    %c0_i32 = arith.constant 0 : i32
    %c0_i32_0 = arith.constant 0 : i32
    return %2, %c0_i32 : i32, i32
  }
  func.func @transform_9(%arg0: i32, %arg1: i32) -> (i32, i32) {
    %c2_i32 = arith.constant 2 : i32
    %0 = arith.muli %arg0, %c2_i32 : i32
    %1 = arith.addi %0, %arg1 : i32
    %c1_i32 = arith.constant 1 : i32
    %2 = arith.minsi %1, %c1_i32 : i32
    %c0_i32 = arith.constant 0 : i32
    %c0_i32_0 = arith.constant 0 : i32
    return %2, %c0_i32 : i32, i32
  }
  func.func @transform_10(%arg0: i32, %arg1: i32) -> (i32, i32) {
    %c2_i32 = arith.constant 2 : i32
    %0 = arith.muli %arg0, %c2_i32 : i32
    %1 = arith.addi %0, %arg1 : i32
    %c1_i32 = arith.constant 1 : i32
    %2 = arith.minsi %1, %c1_i32 : i32
    %c0_i32 = arith.constant 0 : i32
    %c0_i32_0 = arith.constant 0 : i32
    return %2, %c0_i32 : i32, i32
  }
  func.func @transform_11(%arg0: i32, %arg1: i32) -> (i32, i32) {
    %c2_i32 = arith.constant 2 : i32
    %0 = arith.muli %arg0, %c2_i32 : i32
    %1 = arith.addi %0, %arg1 : i32
    %c1_i32 = arith.constant 1 : i32
    %2 = arith.minsi %1, %c1_i32 : i32
    %c0_i32 = arith.constant 0 : i32
    %c0_i32_0 = arith.constant 0 : i32
    return %2, %c0_i32 : i32, i32
  }
  func.func @transform_12(%arg0: i32, %arg1: i32) -> (i32, i32, i32) {
    %c2_i32 = arith.constant 2 : i32
    %0 = arith.muli %arg0, %c2_i32 : i32
    %1 = arith.addi %0, %arg1 : i32
    %c1_i32 = arith.constant 1 : i32
    %2 = arith.minsi %1, %c1_i32 : i32
    %c0_i32 = arith.constant 0 : i32
    %c0_i32_0 = arith.constant 0 : i32
    %c0_i32_1 = arith.constant 0 : i32
    return %c0_i32, %2, %c0_i32_0 : i32, i32, i32
  }
  func.func @transform_13(%arg0: i32, %arg1: i32) -> (i32, i32, i32) {
    %c2_i32 = arith.constant 2 : i32
    %0 = arith.muli %arg0, %c2_i32 : i32
    %1 = arith.addi %0, %arg1 : i32
    %c1_i32 = arith.constant 1 : i32
    %2 = arith.minsi %1, %c1_i32 : i32
    %c0_i32 = arith.constant 0 : i32
    %c0_i32_0 = arith.constant 0 : i32
    %c0_i32_1 = arith.constant 0 : i32
    return %c0_i32, %2, %c0_i32_0 : i32, i32, i32
  }
  func.func @transform_14(%arg0: i32, %arg1: i32) -> (i32, i32, i32, i32) {
    %c0_i32 = arith.constant 0 : i32
    %c0_i32_0 = arith.constant 0 : i32
    %c0_i32_1 = arith.constant 0 : i32
    %c0_i32_2 = arith.constant 0 : i32
    return %arg0, %c0_i32, %c0_i32_0, %c0_i32_1 : i32, i32, i32, i32
  }
}

</mosaic_0001>

<llo_original>
// kernel: tpu_custom_call.1
$region0: #{tpu_custom_call.1}
  #allocation0 [shape = 'u32[]', space=smem, size = 0x4, offset = 0x4, fixed_abs, tag = 'smem constant byte address 0x4 - core index']
  #allocation1 [shape = 'u32[72,128]{1,0:T(1,128)}', space=vmem, size = 0x9000, scoped, tag = 'internal scratch']
  #allocation26 [shape = 's32[]', space=sflag, size = 0x4, offset = 0, fixed_abs, tag = 'sflag constant byte address 0x0 - dummy sync flag']
  #allocation28 [shape = 's32[]', space=sflag, size = 0x4, offset = 0, fixed_abs, tag = 'sflag constant byte address 0x0 - dummy sync flag']
  %s0 = inlined_call_operand.hbm [shape: f32[48,128], index: 0, kind: input, shape index: {}]
  %s1 = inlined_call_operand.hbm [shape: f32[48,128], index: 1, kind: input, shape index: {}]
  %s2 = inlined_call_operand.hbm [shape: f32[48,128], index: 2, kind: input, shape index: {}]
  %s3 = inlined_call_operand.hbm [shape: f32[48,128], index: 3, kind: input, shape index: {}]
  %s4 = inlined_call_operand.hbm [shape: f32[48,128], index: 4, kind: input, shape index: {}]
  %s5 = inlined_call_operand.hbm [shape: f32[48,128], index: 5, kind: input, shape index: {}]
  %s6 = inlined_call_operand.hbm [shape: f32[48,128], index: 6, kind: input, shape index: {}]
  %s7 = inlined_call_operand.hbm [shape: f32[48,128], index: 7, kind: input, shape index: {}]
  %s8 = inlined_call_operand.hbm [shape: f32[48,128], index: 8, kind: input, shape index: {}]
  %s9 = inlined_call_operand.hbm [shape: bf16[48,128], index: 9, kind: input, shape index: {}]
  %s10 = inlined_call_operand.hbm [shape: bf16[48,128], index: 10, kind: input, shape index: {}]
  %s11 = inlined_call_operand.hbm [shape: bf16[48,128], index: 11, kind: input, shape index: {}]
  %s12 = inlined_call_operand.hbm [shape: f32[4,48,128], index: 12, kind: input, shape index: {}]
  %s13 = inlined_call_operand.hbm [shape: bf16[4,48,128], index: 13, kind: input, shape index: {}]
  %s14 = inlined_call_operand.hbm [shape: f32[1,6,8,128], index: 14, kind: output, shape index: {}]
  %s15 = sld [smem:[#allocation0]]
  $region149: #{tpu_custom_call.1} parent=0
    _
  %s17 = ssub.s32 1, %s15
  %s18 = scalar_select 0, %s17, %s15
  $region1: #{tpu_custom_call.1} parent=0
    #allocation2 [shape = 'u8[32768]{0}', space=vmem, size = 0x8000, scoped, tag = 'input window, operand 0']
    #allocation3 [shape = 's32[2]{0}', space=sflag, size = 0x8, scoped, tag = 'scoped memory for tpu_custom_call.1']
    #allocation4 [shape = 's32[2]{0}', space=sflag, size = 0x8, scoped, tag = 'scoped memory for tpu_custom_call.1']
    #allocation5 [shape = 'u8[32768]{0}', space=vmem, size = 0x8000, scoped, tag = 'input window, operand 1']
    #allocation6 [shape = 's32[2]{0}', space=sflag, size = 0x8, scoped, tag = 'scoped memory for tpu_custom_call.1']
    #allocation7 [shape = 'u8[32768]{0}', space=vmem, size = 0x8000, scoped, tag = 'input window, operand 2']
    #allocation8 [shape = 'u8[32768]{0}', space=vmem, size = 0x8000, scoped, tag = 'input window, operand 3']
    #allocation9 [shape = 's32[2]{0}', space=sflag, size = 0x8, scoped, tag = 'scoped memory for tpu_custom_call.1']
    #allocation10 [shape = 'u8[32768]{0}', space=vmem, size = 0x8000, scoped, tag = 'input window, operand 4']
    #allocation11 [shape = 'u8[32768]{0}', space=vmem, size = 0x8000, scoped, tag = 'input window, operand 5']
    #allocation12 [shape = 's32[2]{0}', space=sflag, size = 0x8, scoped, tag = 'scoped memory for tpu_custom_call.1']
    #allocation13 [shape = 'u8[32768]{0}', space=vmem, size = 0x8000, scoped, tag = 'input window, operand 6']
    #allocation14 [shape = 'u8[32768]{0}', space=vmem, size = 0x8000, scoped, tag = 'input window, operand 7']
    #allocation15 [shape = 's32[2]{0}', space=sflag, size = 0x8, scoped, tag = 'scoped memory for tpu_custom_call.1']
    #allocation16 [shape = 'u8[32768]{0}', space=vmem, size = 0x8000, scoped, tag = 'input window, operand 8']
    #allocation17 [shape = 'u8[16384]{0}', space=vmem, size = 0x4000, scoped, tag = 'input window, operand 9']
    #allocation18 [shape = 's32[2]{0}', space=sflag, size = 0x8, scoped, tag = 'scoped memory for tpu_custom_call.1']
    #allocation19 [shape = 'u8[16384]{0}', space=vmem, size = 0x4000, scoped, tag = 'input window, operand 10']
    #allocation20 [shape = 'u8[16384]{0}', space=vmem, size = 0x4000, scoped, tag = 'input window, operand 11']
    #allocation21 [shape = 's32[2]{0}', space=sflag, size = 0x8, scoped, tag = 'scoped memory for tpu_custom_call.1']
    #allocation22 [shape = 'u8[131072]{0}', space=vmem, size = 0x20000, scoped, tag = 'input window, operand 12']
    #allocation23 [shape = 'u8[65536]{0}', space=vmem, size = 0x10000, scoped, tag = 'input window, operand 13']
    #allocation24 [shape = 's32[2]{0}', space=sflag, size = 0x8, scoped, tag = 'scoped memory for tpu_custom_call.1']
    #allocation25 [shape = 'u8[24576]{0}', space=vmem, size = 0x6000, scoped, tag = 'output window, operand 0, single buffered']
    %19 = vsyncpa [#allocation3], 0
    %s20 = scalar_lea.sflag [#allocation3], 1
    %21 = vsyncpa %s20, 0
    %22 = vsyncpa [#allocation6], 0
    %s23 = scalar_lea.sflag [#allocation6], 1
    %24 = vsyncpa %s23, 0
    %25 = vsyncpa [#allocation9], 0
    %s26 = scalar_lea.sflag [#allocation9], 1
    %27 = vsyncpa %s26, 0
    %28 = vsyncpa [#allocation12], 0
    %s29 = scalar_lea.sflag [#allocation12], 1
    %30 = vsyncpa %s29, 0
    %31 = vsyncpa [#allocation15], 0
    %s32 = scalar_lea.sflag [#allocation15], 1
    %33 = vsyncpa %s32, 0
    %34 = vsyncpa [#allocation18], 0
    %s35 = scalar_lea.sflag [#allocation18], 1
    %36 = vsyncpa %s35, 0
    %37 = vsyncpa [#allocation21], 0
    %s38 = scalar_lea.sflag [#allocation21], 1
    %39 = vsyncpa %s38, 0
    %40 = vsyncpa [#allocation24], 0
    %s41 = scalar_lea.sflag [#allocation24], 1
    %42 = vsyncpa %s41, 0
    %43 = vsyncpa [#allocation4], 0
    loop: start=0, step=1, limit=4
    $region2: #{tpu_custom_call.1} parent=1 // loop_pre_header
      _
    $region3: #{tpu_custom_call.1} parent=1 // loop_header
      %s45 = sphi 0, %s49
      %p46 = scmp.ge.s32.totalorder %s45, 4
      %s52 = sphi 0, %s64
      %s53 = sphi 0, %s60
      %s54 = sphi 0, %s52
      %s55 = sphi 0, %s53
      %s56 = sphi 0, %s54
      %s57 = sphi 0, %s55
      %s75 = sphi 0, %s77
      %s78 = sphi 0, %s75
      %s79 = sphi 0, %s78
      %s95 = sphi 0, %s79
      %s109 = sphi 0, %s111
      %s112 = sphi 0, %s109
      %s113 = sphi 0, %s112
      %s129 = sphi 0, %s113
      %s143 = sphi 0, %s145
      %s146 = sphi 0, %s143
      %s147 = sphi 0, %s146
      %s163 = sphi 0, %s147
      %s177 = sphi 0, %s179
      %s180 = sphi 0, %s177
      %s181 = sphi 0, %s180
      %s197 = sphi 0, %s181
      %s211 = sphi 0, %s213
      %s214 = sphi 0, %s211
      %s215 = sphi 0, %s214
      %s231 = sphi 0, %s215
      %s245 = sphi 0, %s247
      %s248 = sphi 0, %s245
      %s249 = sphi 0, %s248
      %s265 = sphi 0, %s249
      %s279 = sphi 0, %s281
      %s282 = sphi 0, %s279
      %s283 = sphi 0, %s282
      %s299 = sphi 0, %s283
      %s313 = sphi 0, %s315
      %s316 = sphi 0, %s313
      %s317 = sphi 0, %s316
      %s333 = sphi 0, %s317
      %s347 = sphi 0, %s349
      %s350 = sphi 0, %s347
      %s351 = sphi 0, %s350
      %s367 = sphi 0, %s351
      %s381 = sphi 0, %s383
      %s384 = sphi 0, %s381
      %s385 = sphi 0, %s384
      %s401 = sphi 0, %s385
      %s415 = sphi 0, %s417
      %s418 = sphi 0, %s415
      %s419 = sphi 0, %s418
      %s435 = sphi 0, %s419
      %s449 = sphi 0, %s451
      %s452 = sphi 0, %s449
      %s453 = sphi 0, %s452
      %s469 = sphi 0, %s453
      %s483 = sphi 0, %s485
      %s486 = sphi 0, %s483
      %s487 = sphi 0, %s486
      %s503 = sphi 0, %s487
      %s517 = sphi 0, %s519
      %s520 = sphi 0, %s517
      %s521 = sphi 0, %s520
      %s537 = sphi 0, %s521
      %s543 = sphi 0, %s545
      %s546 = sphi 0, %s543
      %s547 = sphi 0, %s546
      %s563 = sphi 0, %s547
    $region4: #{tpu_custom_call.1} parent=1 // loop_header_branch
      %48 = sbr.rel (%p46) target = $region8
    $region5: #{tpu_custom_call.1} parent=1 // loop_body
      %s50 = ssub.s32 %s45, 1
      %s51 = ssub.s32 %s45, 2
      %s58 = sadd.s32 1, %s53
      %p59 = scmp.ge.s32.totalorder %s58, 2
      %s60 = scalar_select %p59, 0, %s58
      %s61 = sadd.s32 1, %s52
      %s62 = scalar_select %p59, %s61, %s52
      %p63 = scmp.ge.s32.totalorder %s62, 1
      %s64 = scalar_select %p63, 0, %s62
      %s65 = smul.u32 %s52, 2
      %s66 = sadd.s32 %s65, %s53
      %p67 = scmp.lt.s32.totalorder %s66, 1
      %s68 = scalar_select %p67, %s66, 1
      %s69 = smul.u32 %s64, 2
      %s70 = sadd.s32 %s69, %s60
      %p71 = scmp.lt.s32.totalorder %s70, 1
      %s72 = scalar_select %p71, %s70, 1
      %s73 = ssub.s32 %s68, %s72
      %p74 = scmp.eq.s32.totalorder %s73, 0
      %s76 = sadd.s32 %s75, 1
      %s77 = scalar_select %p74, %s75, %s76
      %p80 = pneg %p74
      %p81 = scmp.eq.s32.totalorder %s45, 1
      %p82 = por %p80, %p81
      %p83 = scmp.ne.s32.totalorder %s75, %s78
      %p84 = scmp.eq.s32.totalorder %s45, 0
      %p85 = por %p83, %p84
      %p86 = scmp.ne.s32.totalorder %s75, %s78
      %p87 = scmp.eq.s32.totalorder %s50, 1
      %p88 = por %p86, %p87
      %p89 = scmp.ne.s32.totalorder %s78, %s79
      %p90 = scmp.eq.s32.totalorder %s50, 0
      %p91 = por %p89, %p90
      %p92 = scmp.ne.s32.totalorder %s78, %s79
      %p93 = scmp.eq.s32.totalorder %s51, 1
      %p94 = por %p92, %p93
      %p96 = scmp.ne.s32.totalorder %s79, %s95
      %p97 = scmp.eq.s32.totalorder %s51, 0
      %p98 = por %p96, %p97
      %s99 = smul.u32 %s52, 2
      %s100 = sadd.s32 %s99, %s53
      %p101 = scmp.lt.s32.totalorder %s100, 1
      %s102 = scalar_select %p101, %s100, 1
      %s103 = smul.u32 %s64, 2
      %s104 = sadd.s32 %s103, %s60
      %p105 = scmp.lt.s32.totalorder %s104, 1
      %s106 = scalar_select %p105, %s104, 1
      %s107 = ssub.s32 %s102, %s106
      %p108 = scmp.eq.s32.totalorder %s107, 0
      %s110 = sadd.s32 %s109, 1
      %s111 = scalar_select %p108, %s109, %s110
      %p114 = pneg %p108
      %p115 = scmp.eq.s32.totalorder %s45, 1
      %p116 = por %p114, %p115
      %p117 = scmp.ne.s32.totalorder %s109, %s112
      %p118 = scmp.eq.s32.totalorder %s45, 0
      %p119 = por %p117, %p118
      %p120 = scmp.ne.s32.totalorder %s109, %s112
      %p121 = scmp.eq.s32.totalorder %s50, 1
      %p122 = por %p120, %p121
      %p123 = scmp.ne.s32.totalorder %s112, %s113
      %p124 = scmp.eq.s32.totalorder %s50, 0
      %p125 = por %p123, %p124
      %p126 = scmp.ne.s32.totalorder %s112, %s113
      %p127 = scmp.eq.s32.totalorder %s51, 1
      %p128 = por %p126, %p127
      %p130 = scmp.ne.s32.totalorder %s113, %s129
      %p131 = scmp.eq.s32.totalorder %s51, 0
      %p132 = por %p130, %p131
      %s133 = smul.u32 %s52, 2
      %s134 = sadd.s32 %s133, %s53
      %p135 = scmp.lt.s32.totalorder %s134, 1
      %s136 = scalar_select %p135, %s134, 1
      %s137 = smul.u32 %s64, 2
      %s138 = sadd.s32 %s137, %s60
      %p139 = scmp.lt.s32.totalorder %s138, 1
      %s140 = scalar_select %p139, %s138, 1
      %s141 = ssub.s32 %s136, %s140
      %p142 = scmp.eq.s32.totalorder %s141, 0
      %s144 = sadd.s32 %s143, 1
      %s145 = scalar_select %p142, %s143, %s144
      %p148 = pneg %p142
      %p149 = scmp.eq.s32.totalorder %s45, 1
      %p150 = por %p148, %p149
      %p151 = scmp.ne.s32.totalorder %s143, %s146
      %p152 = scmp.eq.s32.totalorder %s45, 0
      %p153 = por %p151, %p152
      %p154 = scmp.ne.s32.totalorder %s143, %s146
      %p155 = scmp.eq.s32.totalorder %s50, 1
      %p156 = por %p154, %p155
      %p157 = scmp.ne.s32.totalorder %s146, %s147
      %p158 = scmp.eq.s32.totalorder %s50, 0
      %p159 = por %p157, %p158
      %p160 = scmp.ne.s32.totalorder %s146, %s147
      %p161 = scmp.eq.s32.totalorder %s51, 1
      %p162 = por %p160, %p161
      %p164 = scmp.ne.s32.totalorder %s147, %s163
      %p165 = scmp.eq.s32.totalorder %s51, 0
      %p166 = por %p164, %p165
      %s167 = smul.u32 %s52, 2
      %s168 = sadd.s32 %s167, %s53
      %p169 = scmp.lt.s32.totalorder %s168, 1
      %s170 = scalar_select %p169, %s168, 1
      %s171 = smul.u32 %s64, 2
      %s172 = sadd.s32 %s171, %s60
      %p173 = scmp.lt.s32.totalorder %s172, 1
      %s174 = scalar_select %p173, %s172, 1
      %s175 = ssub.s32 %s170, %s174
      %p176 = scmp.eq.s32.totalorder %s175, 0
      %s178 = sadd.s32 %s177, 1
      %s179 = scalar_select %p176, %s177, %s178
      %p182 = pneg %p176
      %p183 = scmp.eq.s32.totalorder %s45, 1
      %p184 = por %p182, %p183
      %p185 = scmp.ne.s32.totalorder %s177, %s180
      %p186 = scmp.eq.s32.totalorder %s45, 0
      %p187 = por %p185, %p186
      %p188 = scmp.ne.s32.totalorder %s177, %s180
      %p189 = scmp.eq.s32.totalorder %s50, 1
      %p190 = por %p188, %p189
      %p191 = scmp.ne.s32.totalorder %s180, %s181
      %p192 = scmp.eq.s32.totalorder %s50, 0
      %p193 = por %p191, %p192
      %p194 = scmp.ne.s32.totalorder %s180, %s181
      %p195 = scmp.eq.s32.totalorder %s51, 1
      %p196 = por %p194, %p195
      %p198 = scmp.ne.s32.totalorder %s181, %s197
      %p199 = scmp.eq.s32.totalorder %s51, 0
      %p200 = por %p198, %p199
      %s201 = smul.u32 %s52, 2
      %s202 = sadd.s32 %s201, %s53
      %p203 = scmp.lt.s32.totalorder %s202, 1
      %s204 = scalar_select %p203, %s202, 1
      %s205 = smul.u32 %s64, 2
      %s206 = sadd.s32 %s205, %s60
      %p207 = scmp.lt.s32.totalorder %s206, 1
      %s208 = scalar_select %p207, %s206, 1
      %s209 = ssub.s32 %s204, %s208
      %p210 = scmp.eq.s32.totalorder %s209, 0
      %s212 = sadd.s32 %s211, 1
      %s213 = scalar_select %p210, %s211, %s212
      %p216 = pneg %p210
      %p217 = scmp.eq.s32.totalorder %s45, 1
      %p218 = por %p216, %p217
      %p219 = scmp.ne.s32.totalorder %s211, %s214
      %p220 = scmp.eq.s32.totalorder %s45, 0
      %p221 = por %p219, %p220
      %p222 = scmp.ne.s32.totalorder %s211, %s214
      %p223 = scmp.eq.s32.totalorder %s50, 1
      %p224 = por %p222, %p223
      %p225 = scmp.ne.s32.totalorder %s214, %s215
      %p226 = scmp.eq.s32.totalorder %s50, 0
      %p227 = por %p225, %p226
      %p228 = scmp.ne.s32.totalorder %s214, %s215
      %p229 = scmp.eq.s32.totalorder %s51, 1
      %p230 = por %p228, %p229
      %p232 = scmp.ne.s32.totalorder %s215, %s231
      %p233 = scmp.eq.s32.totalorder %s51, 0
      %p234 = por %p232, %p233
      %s235 = smul.u32 %s52, 2
      %s236 = sadd.s32 %s235, %s53
      %p237 = scmp.lt.s32.totalorder %s236, 1
      %s238 = scalar_select %p237, %s236, 1
      %s239 = smul.u32 %s64, 2
      %s240 = sadd.s32 %s239, %s60
      %p241 = scmp.lt.s32.totalorder %s240, 1
      %s242 = scalar_select %p241, %s240, 1
      %s243 = ssub.s32 %s238, %s242
      %p244 = scmp.eq.s32.totalorder %s243, 0
      %s246 = sadd.s32 %s245, 1
      %s247 = scalar_select %p244, %s245, %s246
      %p250 = pneg %p244
      %p251 = scmp.eq.s32.totalorder %s45, 1
      %p252 = por %p250, %p251
      %p253 = scmp.ne.s32.totalorder %s245, %s248
      %p254 = scmp.eq.s32.totalorder %s45, 0
      %p255 = por %p253, %p254
      %p256 = scmp.ne.s32.totalorder %s245, %s248
      %p257 = scmp.eq.s32.totalorder %s50, 1
      %p258 = por %p256, %p257
      %p259 = scmp.ne.s32.totalorder %s248, %s249
      %p260 = scmp.eq.s32.totalorder %s50, 0
      %p261 = por %p259, %p260
      %p262 = scmp.ne.s32.totalorder %s248, %s249
      %p263 = scmp.eq.s32.totalorder %s51, 1
      %p264 = por %p262, %p263
      %p266 = scmp.ne.s32.totalorder %s249, %s265
      %p267 = scmp.eq.s32.totalorder %s51, 0
      %p268 = por %p266, %p267
      %s269 = smul.u32 %s52, 2
      %s270 = sadd.s32 %s269, %s53
      %p271 = scmp.lt.s32.totalorder %s270, 1
      %s272 = scalar_select %p271, %s270, 1
      %s273 = smul.u32 %s64, 2
      %s274 = sadd.s32 %s273, %s60
      %p275 = scmp.lt.s32.totalorder %s274, 1
      %s276 = scalar_select %p275, %s274, 1
      %s277 = ssub.s32 %s272, %s276
      %p278 = scmp.eq.s32.totalorder %s277, 0
      %s280 = sadd.s32 %s279, 1
      %s281 = scalar_select %p278, %s279, %s280
      %p284 = pneg %p278
      %p285 = scmp.eq.s32.totalorder %s45, 1
      %p286 = por %p284, %p285
      %p287 = scmp.ne.s32.totalorder %s279, %s282
      %p288 = scmp.eq.s32.totalorder %s45, 0
      %p289 = por %p287, %p288
      %p290 = scmp.ne.s32.totalorder %s279, %s282
      %p291 = scmp.eq.s32.totalorder %s50, 1
      %p292 = por %p290, %p291
      %p293 = scmp.ne.s32.totalorder %s282, %s283
      %p294 = scmp.eq.s32.totalorder %s50, 0
      %p295 = por %p293, %p294
      %p296 = scmp.ne.s32.totalorder %s282, %s283
      %p297 = scmp.eq.s32.totalorder %s51, 1
      %p298 = por %p296, %p297
      %p300 = scmp.ne.s32.totalorder %s283, %s299
      %p301 = scmp.eq.s32.totalorder %s51, 0
      %p302 = por %p300, %p301
      %s303 = smul.u32 %s52, 2
      %s304 = sadd.s32 %s303, %s53
      %p305 = scmp.lt.s32.totalorder %s304, 1
      %s306 = scalar_select %p305, %s304, 1
      %s307 = smul.u32 %s64, 2
      %s308 = sadd.s32 %s307, %s60
      %p309 = scmp.lt.s32.totalorder %s308, 1
      %s310 = scalar_select %p309, %s308, 1
      %s311 = ssub.s32 %s306, %s310
      %p312 = scmp.eq.s32.totalorder %s311, 0
      %s314 = sadd.s32 %s313, 1
      %s315 = scalar_select %p312, %s313, %s314
      %p318 = pneg %p312
      %p319 = scmp.eq.s32.totalorder %s45, 1
      %p320 = por %p318, %p319
      %p321 = scmp.ne.s32.totalorder %s313, %s316
      %p322 = scmp.eq.s32.totalorder %s45, 0
      %p323 = por %p321, %p322
      %p324 = scmp.ne.s32.totalorder %s313, %s316
      %p325 = scmp.eq.s32.totalorder %s50, 1
      %p326 = por %p324, %p325
      %p327 = scmp.ne.s32.totalorder %s316, %s317
      %p328 = scmp.eq.s32.totalorder %s50, 0
      %p329 = por %p327, %p328
      %p330 = scmp.ne.s32.totalorder %s316, %s317
      %p331 = scmp.eq.s32.totalorder %s51, 1
      %p332 = por %p330, %p331
      %p334 = scmp.ne.s32.totalorder %s317, %s333
      %p335 = scmp.eq.s32.totalorder %s51, 0
      %p336 = por %p334, %p335
      %s337 = smul.u32 %s52, 2
      %s338 = sadd.s32 %s337, %s53
      %p339 = scmp.lt.s32.totalorder %s338, 1
      %s340 = scalar_select %p339, %s338, 1
      %s341 = smul.u32 %s64, 2
      %s342 = sadd.s32 %s341, %s60
      %p343 = scmp.lt.s32.totalorder %s342, 1
      %s344 = scalar_select %p343, %s342, 1
      %s345 = ssub.s32 %s340, %s344
      %p346 = scmp.eq.s32.totalorder %s345, 0
      %s348 = sadd.s32 %s347, 1
      %s349 = scalar_select %p346, %s347, %s348
      %p352 = pneg %p346
      %p353 = scmp.eq.s32.totalorder %s45, 1
      %p354 = por %p352, %p353
      %p355 = scmp.ne.s32.totalorder %s347, %s350
      %p356 = scmp.eq.s32.totalorder %s45, 0
      %p357 = por %p355, %p356
      %p358 = scmp.ne.s32.totalorder %s347, %s350
      %p359 = scmp.eq.s32.totalorder %s50, 1
      %p360 = por %p358, %p359
      %p361 = scmp.ne.s32.totalorder %s350, %s351
      %p362 = scmp.eq.s32.totalorder %s50, 0
      %p363 = por %p361, %p362
      %p364 = scmp.ne.s32.totalorder %s350, %s351
      %p365 = scmp.eq.s32.totalorder %s51, 1
      %p366 = por %p364, %p365
      %p368 = scmp.ne.s32.totalorder %s351, %s367
      %p369 = scmp.eq.s32.totalorder %s51, 0
      %p370 = por %p368, %p369
      %s371 = smul.u32 %s52, 2
      %s372 = sadd.s32 %s371, %s53
      %p373 = scmp.lt.s32.totalorder %s372, 1
      %s374 = scalar_select %p373, %s372, 1
      %s375 = smul.u32 %s64, 2
      %s376 = sadd.s32 %s375, %s60
      %p377 = scmp.lt.s32.totalorder %s376, 1
      %s378 = scalar_select %p377, %s376, 1
      %s379 = ssub.s32 %s374, %s378
      %p380 = scmp.eq.s32.totalorder %s379, 0
      %s382 = sadd.s32 %s381, 1
      %s383 = scalar_select %p380, %s381, %s382
      %p386 = pneg %p380
      %p387 = scmp.eq.s32.totalorder %s45, 1
      %p388 = por %p386, %p387
      %p389 = scmp.ne.s32.totalorder %s381, %s384
      %p390 = scmp.eq.s32.totalorder %s45, 0
      %p391 = por %p389, %p390
      %p392 = scmp.ne.s32.totalorder %s381, %s384
      %p393 = scmp.eq.s32.totalorder %s50, 1
      %p394 = por %p392, %p393
      %p395 = scmp.ne.s32.totalorder %s384, %s385
      %p396 = scmp.eq.s32.totalorder %s50, 0
      %p397 = por %p395, %p396
      %p398 = scmp.ne.s32.totalorder %s384, %s385
      %p399 = scmp.eq.s32.totalorder %s51, 1
      %p400 = por %p398, %p399
      %p402 = scmp.ne.s32.totalorder %s385, %s401
      %p403 = scmp.eq.s32.totalorder %s51, 0
      %p404 = por %p402, %p403
      %s405 = smul.u32 %s52, 2
      %s406 = sadd.s32 %s405, %s53
      %p407 = scmp.lt.s32.totalorder %s406, 1
      %s408 = scalar_select %p407, %s406, 1
      %s409 = smul.u32 %s64, 2
      %s410 = sadd.s32 %s409, %s60
      %p411 = scmp.lt.s32.totalorder %s410, 1
      %s412 = scalar_select %p411, %s410, 1
      %s413 = ssub.s32 %s408, %s412
      %p414 = scmp.eq.s32.totalorder %s413, 0
      %s416 = sadd.s32 %s415, 1
      %s417 = scalar_select %p414, %s415, %s416
      %p420 = pneg %p414
      %p421 = scmp.eq.s32.totalorder %s45, 1
      %p422 = por %p420, %p421
      %p423 = scmp.ne.s32.totalorder %s415, %s418
      %p424 = scmp.eq.s32.totalorder %s45, 0
      %p425 = por %p423, %p424
      %p426 = scmp.ne.s32.totalorder %s415, %s418
      %p427 = scmp.eq.s32.totalorder %s50, 1
      %p428 = por %p426, %p427
      %p429 = scmp.ne.s32.totalorder %s418, %s419
      %p430 = scmp.eq.s32.totalorder %s50, 0
      %p431 = por %p429, %p430
      %p432 = scmp.ne.s32.totalorder %s418, %s419
      %p433 = scmp.eq.s32.totalorder %s51, 1
      %p434 = por %p432, %p433
      %p436 = scmp.ne.s32.totalorder %s419, %s435
      %p437 = scmp.eq.s32.totalorder %s51, 0
      %p438 = por %p436, %p437
      %s439 = smul.u32 %s52, 2
      %s440 = sadd.s32 %s439, %s53
      %p441 = scmp.lt.s32.totalorder %s440, 1
      %s442 = scalar_select %p441, %s440, 1
      %s443 = smul.u32 %s64, 2
      %s444 = sadd.s32 %s443, %s60
      %p445 = scmp.lt.s32.totalorder %s444, 1
      %s446 = scalar_select %p445, %s444, 1
      %s447 = ssub.s32 %s442, %s446
      %p448 = scmp.eq.s32.totalorder %s447, 0
      %s450 = sadd.s32 %s449, 1
      %s451 = scalar_select %p448, %s449, %s450
      %p454 = pneg %p448
      %p455 = scmp.eq.s32.totalorder %s45, 1
      %p456 = por %p454, %p455
      %p457 = scmp.ne.s32.totalorder %s449, %s452
      %p458 = scmp.eq.s32.totalorder %s45, 0
      %p459 = por %p457, %p458
      %p460 = scmp.ne.s32.totalorder %s449, %s452
      %p461 = scmp.eq.s32.totalorder %s50, 1
      %p462 = por %p460, %p461
      %p463 = scmp.ne.s32.totalorder %s452, %s453
      %p464 = scmp.eq.s32.totalorder %s50, 0
      %p465 = por %p463, %p464
      %p466 = scmp.ne.s32.totalorder %s452, %s453
      %p467 = scmp.eq.s32.totalorder %s51, 1
      %p468 = por %p466, %p467
      %p470 = scmp.ne.s32.totalorder %s453, %s469
      %p471 = scmp.eq.s32.totalorder %s51, 0
      %p472 = por %p470, %p471
      %s473 = smul.u32 %s52, 2
      %s474 = sadd.s32 %s473, %s53
      %p475 = scmp.lt.s32.totalorder %s474, 1
      %s476 = scalar_select %p475, %s474, 1
      %s477 = smul.u32 %s64, 2
      %s478 = sadd.s32 %s477, %s60
      %p479 = scmp.lt.s32.totalorder %s478, 1
      %s480 = scalar_select %p479, %s478, 1
      %s481 = ssub.s32 %s476, %s480
      %p482 = scmp.eq.s32.totalorder %s481, 0
      %s484 = sadd.s32 %s483, 1
      %s485 = scalar_select %p482, %s483, %s484
      %p488 = pneg %p482
      %p489 = scmp.eq.s32.totalorder %s45, 1
      %p490 = por %p488, %p489
      %p491 = scmp.ne.s32.totalorder %s483, %s486
      %p492 = scmp.eq.s32.totalorder %s45, 0
      %p493 = por %p491, %p492
      %p494 = scmp.ne.s32.totalorder %s483, %s486
      %p495 = scmp.eq.s32.totalorder %s50, 1
      %p496 = por %p494, %p495
      %p497 = scmp.ne.s32.totalorder %s486, %s487
      %p498 = scmp.eq.s32.totalorder %s50, 0
      %p499 = por %p497, %p498
      %p500 = scmp.ne.s32.totalorder %s486, %s487
      %p501 = scmp.eq.s32.totalorder %s51, 1
      %p502 = por %p500, %p501
      %p504 = scmp.ne.s32.totalorder %s487, %s503
      %p505 = scmp.eq.s32.totalorder %s51, 0
      %p506 = por %p504, %p505
      %s507 = smul.u32 %s52, 2
      %s508 = sadd.s32 %s507, %s53
      %p509 = scmp.lt.s32.totalorder %s508, 1
      %s510 = scalar_select %p509, %s508, 1
      %s511 = smul.u32 %s64, 2
      %s512 = sadd.s32 %s511, %s60
      %p513 = scmp.lt.s32.totalorder %s512, 1
      %s514 = scalar_select %p513, %s512, 1
      %s515 = ssub.s32 %s510, %s514
      %p516 = scmp.eq.s32.totalorder %s515, 0
      %s518 = sadd.s32 %s517, 1
      %s519 = scalar_select %p516, %s517, %s518
      %p522 = pneg %p516
      %p523 = scmp.eq.s32.totalorder %s45, 1
      %p524 = por %p522, %p523
      %p525 = scmp.ne.s32.totalorder %s517, %s520
      %p526 = scmp.eq.s32.totalorder %s45, 0
      %p527 = por %p525, %p526
      %p528 = scmp.ne.s32.totalorder %s517, %s520
      %p529 = scmp.eq.s32.totalorder %s50, 1
      %p530 = por %p528, %p529
      %p531 = scmp.ne.s32.totalorder %s520, %s521
      %p532 = scmp.eq.s32.totalorder %s50, 0
      %p533 = por %p531, %p532
      %p534 = scmp.ne.s32.totalorder %s520, %s521
      %p535 = scmp.eq.s32.totalorder %s51, 1
      %p536 = por %p534, %p535
      %p538 = scmp.ne.s32.totalorder %s521, %s537
      %p539 = scmp.eq.s32.totalorder %s51, 0
      %p540 = por %p538, %p539
      %s541 = ssub.s32 %s52, %s64
      %p542 = scmp.eq.s32.totalorder %s541, 0
      %s544 = sadd.s32 %s543, 1
      %s545 = scalar_select %p542, %s543, %s544
      %p548 = pneg %p542
      %p549 = scmp.eq.s32.totalorder %s45, 1
      %p550 = por %p548, %p549
      %p551 = scmp.ne.s32.totalorder %s543, %s546
      %p552 = scmp.eq.s32.totalorder %s45, 0
      %p553 = por %p551, %p552
      %p554 = scmp.ne.s32.totalorder %s543, %s546
      %p555 = scmp.eq.s32.totalorder %s50, 1
      %p556 = por %p554, %p555
      %p557 = scmp.ne.s32.totalorder %s546, %s547
      %p558 = scmp.eq.s32.totalorder %s50, 0
      %p559 = por %p557, %p558
      %p560 = scmp.ne.s32.totalorder %s546, %s547
      %p561 = scmp.eq.s32.totalorder %s51, 1
      %p562 = por %p560, %p561
      %p564 = scmp.ne.s32.totalorder %s547, %s563
      %p565 = scmp.eq.s32.totalorder %s51, 0
      %p566 = por %p564, %p565
      %p567 = scmp.le.s32.totalorder 1, %s45
      %p568 = scmp.lt.s32.totalorder %s45, 3
      %p569 = pnand %p567, %p568
      %p570 = pneg %p569
      // Predicated region
      $region9: #{tpu_custom_call.1} parent=5 // pred_check
        _
      $region10: #{tpu_custom_call.1} parent=5 // pred_check_branch
        %572 = sbr.rel (%p569) target = $region12
      $region11: #{tpu_custom_call.1} parent=5 // pred_region
        %s573 = ssub.s32 %s45, 1
      $region12: #{tpu_custom_call.1} parent=5 // pred_fallthru
        _
      %p574 = scmp.lt.s32.totalorder %s45, 2
      // Predicated region
      $region13: #{tpu_custom_call.1} parent=5 // pred_check
        %p575 = pneg %p574
      $region14: #{tpu_custom_call.1} parent=5 // pred_check_branch
        %577 = sbr.rel (%p575) target = $region16
      $region15: #{tpu_custom_call.1} parent=5 // pred_region
        // Predicated region
        $region17: #{tpu_custom_call.1} parent=15 // pred_check
          %p578 = pneg %p85
        $region18: #{tpu_custom_call.1} parent=15 // pred_check_branch
          %580 = sbr.rel (%p578) target = $region20
        $region19: #{tpu_custom_call.1} parent=15 // pred_region
          %s581 = sand.u32 %s75, 1
          %s582 = scalar_lea.sflag [#allocation3], %s581
          %s583 = sand.u32 %s75, 1
          %s584 = smul.addr %s583, 32
          %s585 = scalar_lea.vmem [#allocation2], %s584
          %s586 = smul.u32 %s52, 2
          %s587 = sadd.s32 %s586, %s53
          %p588 = scmp.lt.s32.totalorder %s587, 1
          %s589 = scalar_select %p588, %s587, 1
          %s590 = smul.u32 4, %s589
          %s591 = ssub.s32 6, %s590
          %p592 = scmp.lt.s32.totalorder %s591, 4
          %s593 = scalar_select %p592, %s591, 4
          %s594 = smul.u32 8, %s593
          %s595 = ssub.s32 32, %s594
          %s596 = sshll.u32 %s595, 4
          %597 = vsyncadd %s582, %s596
          %p598 = scmp.ne.s32.totalorder 0, %s594
          %s599 = smul.addr %s590, 8
          %s600 = scalar_lea.hbm %s0, %s599
          %s601 = smul.u32 8, %s593
          %s602 = sshll.u32 %s600, 4
          %s603 = int_to_ptr.hbm [resolvable:$true] %s602
          %s604 = sshll.u32 %s585, 4
          %s605 = int_to_ptr.vmem [resolvable:$true] %s604
          %s606 = sshll.u32 %s601, 4
          %610 = dma.hbm_to_vmem [thread:$0]  (%p598), %s603, %s606, %s605, %s582, 128, 128, 8
        $region20: #{tpu_custom_call.1} parent=15 // pred_fallthru
          _
        // Predicated region
        $region21: #{tpu_custom_call.1} parent=15 // pred_check
          %p611 = pneg %p119
        $region22: #{tpu_custom_call.1} parent=15 // pred_check_branch
          %613 = sbr.rel (%p611) target = $region24
        $region23: #{tpu_custom_call.1} parent=15 // pred_region
          %s614 = sand.u32 %s45, 1
          %s615 = scalar_lea.sflag [#allocation6], %s614
          %s616 = sand.u32 %s109, 1
          %s617 = smul.addr %s616, 32
          %s618 = scalar_lea.vmem [#allocation5], %s617
          %s619 = smul.u32 %s52, 2
          %s620 = sadd.s32 %s619, %s53
          %p621 = scmp.lt.s32.totalorder %s620, 1
          %s622 = scalar_select %p621, %s620, 1
          %s623 = smul.u32 4, %s622
          %s624 = ssub.s32 6, %s623
          %p625 = scmp.lt.s32.totalorder %s624, 4
          %s626 = scalar_select %p625, %s624, 4
          %s627 = smul.u32 8, %s626
          %s628 = ssub.s32 32, %s627
          %s629 = sshll.u32 %s628, 4
          %630 = vsyncadd %s615, %s629
          %p631 = scmp.ne.s32.totalorder 0, %s627
          %s632 = smul.addr %s623, 8
          %s633 = scalar_lea.hbm %s1, %s632
          %s634 = smul.u32 8, %s626
          %s635 = sshll.u32 %s633, 4
          %s636 = int_to_ptr.hbm [resolvable:$true] %s635
          %s637 = sshll.u32 %s618, 4
          %s638 = int_to_ptr.vmem [resolvable:$true] %s637
          %s639 = sshll.u32 %s634, 4
          %643 = dma.hbm_to_vmem [thread:$0]  (%p631), %s636, %s639, %s638, %s615, 128, 128, 8
        $region24: #{tpu_custom_call.1} parent=15 // pred_fallthru
          _
        // Predicated region
        $region25: #{tpu_custom_call.1} parent=15 // pred_check
          %p644 = pneg %p153
        $region26: #{tpu_custom_call.1} parent=15 // pred_check_branch
          %646 = sbr.rel (%p644) target = $region28
        $region27: #{tpu_custom_call.1} parent=15 // pred_region
          %s647 = sand.u32 %s45, 1
          %s648 = scalar_lea.sflag [#allocation6], %s647
          %s649 = sand.u32 %s143, 1
          %s650 = smul.addr %s649, 32
          %s651 = scalar_lea.vmem [#allocation7], %s650
          %s652 = smul.u32 %s52, 2
          %s653 = sadd.s32 %s652, %s53
          %p654 = scmp.lt.s32.totalorder %s653, 1
          %s655 = scalar_select %p654, %s653, 1
          %s656 = smul.u32 4, %s655
          %s657 = ssub.s32 6, %s656
          %p658 = scmp.lt.s32.totalorder %s657, 4
          %s659 = scalar_select %p658, %s657, 4
          %s660 = smul.u32 8, %s659
          %s661 = ssub.s32 32, %s660
          %s662 = sshll.u32 %s661, 4
          %663 = vsyncadd %s648, %s662
          %p664 = scmp.ne.s32.totalorder 0, %s660
          %s665 = smul.addr %s656, 8
          %s666 = scalar_lea.hbm %s2, %s665
          %s667 = smul.u32 8, %s659
          %s668 = sshll.u32 %s666, 4
          %s669 = int_to_ptr.hbm [resolvable:$true] %s668
          %s670 = sshll.u32 %s651, 4
          %s671 = int_to_ptr.vmem [resolvable:$true] %s670
          %s672 = sshll.u32 %s667, 4
          %676 = dma.hbm_to_vmem [thread:$0]  (%p664), %s669, %s672, %s671, %s648, 128, 128, 8
        $region28: #{tpu_custom_call.1} parent=15 // pred_fallthru
          _
        // Predicated region
        $region29: #{tpu_custom_call.1} parent=15 // pred_check
          %p677 = pneg %p187
        $region30: #{tpu_custom_call.1} parent=15 // pred_check_branch
          %679 = sbr.rel (%p677) target = $region32
        $region31: #{tpu_custom_call.1} parent=15 // pred_region
          %s680 = sand.u32 %s45, 1
          %s681 = scalar_lea.sflag [#allocation9], %s680
          %s682 = sand.u32 %s177, 1
          %s683 = smul.addr %s682, 32
          %s684 = scalar_lea.vmem [#allocation8], %s683
          %s685 = smul.u32 %s52, 2
          %s686 = sadd.s32 %s685, %s53
          %p687 = scmp.lt.s32.totalorder %s686, 1
          %s688 = scalar_select %p687, %s686, 1
          %s689 = smul.u32 4, %s688
          %s690 = ssub.s32 6, %s689
          %p691 = scmp.lt.s32.totalorder %s690, 4
          %s692 = scalar_select %p691, %s690, 4
          %s693 = smul.u32 8, %s692
          %s694 = ssub.s32 32, %s693
          %s695 = sshll.u32 %s694, 4
          %696 = vsyncadd %s681, %s695
          %p697 = scmp.ne.s32.totalorder 0, %s693
          %s698 = smul.addr %s689, 8
          %s699 = scalar_lea.hbm %s3, %s698
          %s700 = smul.u32 8, %s692
          %s701 = sshll.u32 %s699, 4
          %s702 = int_to_ptr.hbm [resolvable:$true] %s701
          %s703 = sshll.u32 %s684, 4
          %s704 = int_to_ptr.vmem [resolvable:$true] %s703
          %s705 = sshll.u32 %s700, 4
          %709 = dma.hbm_to_vmem [thread:$0]  (%p697), %s702, %s705, %s704, %s681, 128, 128, 8
        $region32: #{tpu_custom_call.1} parent=15 // pred_fallthru
          _
        // Predicated region
        $region33: #{tpu_custom_call.1} parent=15 // pred_check
          %p710 = pneg %p221
        $region34: #{tpu_custom_call.1} parent=15 // pred_check_branch
          %712 = sbr.rel (%p710) target = $region36
        $region35: #{tpu_custom_call.1} parent=15 // pred_region
          %s713 = sand.u32 %s45, 1
          %s714 = scalar_lea.sflag [#allocation9], %s713
          %s715 = sand.u32 %s211, 1
          %s716 = smul.addr %s715, 32
          %s717 = scalar_lea.vmem [#allocation10], %s716
          %s718 = smul.u32 %s52, 2
          %s719 = sadd.s32 %s718, %s53
          %p720 = scmp.lt.s32.totalorder %s719, 1
          %s721 = scalar_select %p720, %s719, 1
          %s722 = smul.u32 4, %s721
          %s723 = ssub.s32 6, %s722
          %p724 = scmp.lt.s32.totalorder %s723, 4
          %s725 = scalar_select %p724, %s723, 4
          %s726 = smul.u32 8, %s725
          %s727 = ssub.s32 32, %s726
          %s728 = sshll.u32 %s727, 4
          %729 = vsyncadd %s714, %s728
          %p730 = scmp.ne.s32.totalorder 0, %s726
          %s731 = smul.addr %s722, 8
          %s732 = scalar_lea.hbm %s4, %s731
          %s733 = smul.u32 8, %s725
          %s734 = sshll.u32 %s732, 4
          %s735 = int_to_ptr.hbm [resolvable:$true] %s734
          %s736 = sshll.u32 %s717, 4
          %s737 = int_to_ptr.vmem [resolvable:$true] %s736
          %s738 = sshll.u32 %s733, 4
          %742 = dma.hbm_to_vmem [thread:$0]  (%p730), %s735, %s738, %s737, %s714, 128, 128, 8
        $region36: #{tpu_custom_call.1} parent=15 // pred_fallthru
          _
        // Predicated region
        $region37: #{tpu_custom_call.1} parent=15 // pred_check
          %p743 = pneg %p255
        $region38: #{tpu_custom_call.1} parent=15 // pred_check_branch
          %745 = sbr.rel (%p743) target = $region40
        $region39: #{tpu_custom_call.1} parent=15 // pred_region
          %s746 = sand.u32 %s45, 1
          %s747 = scalar_lea.sflag [#allocation12], %s746
          %s748 = sand.u32 %s245, 1
          %s749 = smul.addr %s748, 32
          %s750 = scalar_lea.vmem [#allocation11], %s749
          %s751 = smul.u32 %s52, 2
          %s752 = sadd.s32 %s751, %s53
          %p753 = scmp.lt.s32.totalorder %s752, 1
          %s754 = scalar_select %p753, %s752, 1
          %s755 = smul.u32 4, %s754
          %s756 = ssub.s32 6, %s755
          %p757 = scmp.lt.s32.totalorder %s756, 4
          %s758 = scalar_select %p757, %s756, 4
          %s759 = smul.u32 8, %s758
          %s760 = ssub.s32 32, %s759
          %s761 = sshll.u32 %s760, 4
          %762 = vsyncadd %s747, %s761
          %p763 = scmp.ne.s32.totalorder 0, %s759
          %s764 = smul.addr %s755, 8
          %s765 = scalar_lea.hbm %s5, %s764
          %s766 = smul.u32 8, %s758
          %s767 = sshll.u32 %s765, 4
          %s768 = int_to_ptr.hbm [resolvable:$true] %s767
          %s769 = sshll.u32 %s750, 4
          %s770 = int_to_ptr.vmem [resolvable:$true] %s769
          %s771 = sshll.u32 %s766, 4
          %775 = dma.hbm_to_vmem [thread:$0]  (%p763), %s768, %s771, %s770, %s747, 128, 128, 8
        $region40: #{tpu_custom_call.1} parent=15 // pred_fallthru
          _
        // Predicated region
        $region41: #{tpu_custom_call.1} parent=15 // pred_check
          %p776 = pneg %p289
        $region42: #{tpu_custom_call.1} parent=15 // pred_check_branch
          %778 = sbr.rel (%p776) target = $region44
        $region43: #{tpu_custom_call.1} parent=15 // pred_region
          %s779 = sand.u32 %s45, 1
          %s780 = scalar_lea.sflag [#allocation12], %s779
          %s781 = sand.u32 %s279, 1
          %s782 = smul.addr %s781, 32
          %s783 = scalar_lea.vmem [#allocation13], %s782
          %s784 = smul.u32 %s52, 2
          %s785 = sadd.s32 %s784, %s53
          %p786 = scmp.lt.s32.totalorder %s785, 1
          %s787 = scalar_select %p786, %s785, 1
          %s788 = smul.u32 4, %s787
          %s789 = ssub.s32 6, %s788
          %p790 = scmp.lt.s32.totalorder %s789, 4
          %s791 = scalar_select %p790, %s789, 4
          %s792 = smul.u32 8, %s791
          %s793 = ssub.s32 32, %s792
          %s794 = sshll.u32 %s793, 4
          %795 = vsyncadd %s780, %s794
          %p796 = scmp.ne.s32.totalorder 0, %s792
          %s797 = smul.addr %s788, 8
          %s798 = scalar_lea.hbm %s6, %s797
          %s799 = smul.u32 8, %s791
          %s800 = sshll.u32 %s798, 4
          %s801 = int_to_ptr.hbm [resolvable:$true] %s800
          %s802 = sshll.u32 %s783, 4
          %s803 = int_to_ptr.vmem [resolvable:$true] %s802
          %s804 = sshll.u32 %s799, 4
          %808 = dma.hbm_to_vmem [thread:$0]  (%p796), %s801, %s804, %s803, %s780, 128, 128, 8
        $region44: #{tpu_custom_call.1} parent=15 // pred_fallthru
          _
        // Predicated region
        $region45: #{tpu_custom_call.1} parent=15 // pred_check
          %p809 = pneg %p323
        $region46: #{tpu_custom_call.1} parent=15 // pred_check_branch
          %811 = sbr.rel (%p809) target = $region48
        $region47: #{tpu_custom_call.1} parent=15 // pred_region
          %s812 = sand.u32 %s45, 1
          %s813 = scalar_lea.sflag [#allocation15], %s812
          %s814 = sand.u32 %s313, 1
          %s815 = smul.addr %s814, 32
          %s816 = scalar_lea.vmem [#allocation14], %s815
          %s817 = smul.u32 %s52, 2
          %s818 = sadd.s32 %s817, %s53
          %p819 = scmp.lt.s32.totalorder %s818, 1
          %s820 = scalar_select %p819, %s818, 1
          %s821 = smul.u32 4, %s820
          %s822 = ssub.s32 6, %s821
          %p823 = scmp.lt.s32.totalorder %s822, 4
          %s824 = scalar_select %p823, %s822, 4
          %s825 = smul.u32 8, %s824
          %s826 = ssub.s32 32, %s825
          %s827 = sshll.u32 %s826, 4
          %828 = vsyncadd %s813, %s827
          %p829 = scmp.ne.s32.totalorder 0, %s825
          %s830 = smul.addr %s821, 8
          %s831 = scalar_lea.hbm %s7, %s830
          %s832 = smul.u32 8, %s824
          %s833 = sshll.u32 %s831, 4
          %s834 = int_to_ptr.hbm [resolvable:$true] %s833
          %s835 = sshll.u32 %s816, 4
          %s836 = int_to_ptr.vmem [resolvable:$true] %s835
          %s837 = sshll.u32 %s832, 4
          %841 = dma.hbm_to_vmem [thread:$0]  (%p829), %s834, %s837, %s836, %s813, 128, 128, 8
        $region48: #{tpu_custom_call.1} parent=15 // pred_fallthru
          _
        // Predicated region
        $region49: #{tpu_custom_call.1} parent=15 // pred_check
          %p842 = pneg %p357
        $region50: #{tpu_custom_call.1} parent=15 // pred_check_branch
          %844 = sbr.rel (%p842) target = $region52
        $region51: #{tpu_custom_call.1} parent=15 // pred_region
          %s845 = sand.u32 %s45, 1
          %s846 = scalar_lea.sflag [#allocation15], %s845
          %s847 = sand.u32 %s347, 1
          %s848 = smul.addr %s847, 32
          %s849 = scalar_lea.vmem [#allocation16], %s848
          %s850 = smul.u32 %s52, 2
          %s851 = sadd.s32 %s850, %s53
          %p852 = scmp.lt.s32.totalorder %s851, 1
          %s853 = scalar_select %p852, %s851, 1
          %s854 = smul.u32 4, %s853
          %s855 = ssub.s32 6, %s854
          %p856 = scmp.lt.s32.totalorder %s855, 4
          %s857 = scalar_select %p856, %s855, 4
          %s858 = smul.u32 8, %s857
          %s859 = ssub.s32 32, %s858
          %s860 = sshll.u32 %s859, 4
          %861 = vsyncadd %s846, %s860
          %p862 = scmp.ne.s32.totalorder 0, %s858
          %s863 = smul.addr %s854, 8
          %s864 = scalar_lea.hbm %s8, %s863
          %s865 = smul.u32 8, %s857
          %s866 = sshll.u32 %s864, 4
          %s867 = int_to_ptr.hbm [resolvable:$true] %s866
          %s868 = sshll.u32 %s849, 4
          %s869 = int_to_ptr.vmem [resolvable:$true] %s868
          %s870 = sshll.u32 %s865, 4
          %874 = dma.hbm_to_vmem [thread:$0]  (%p862), %s867, %s870, %s869, %s846, 128, 128, 8
        $region52: #{tpu_custom_call.1} parent=15 // pred_fallthru
          _
        // Predicated region
        $region53: #{tpu_custom_call.1} parent=15 // pred_check
          %p875 = pneg %p391
        $region54: #{tpu_custom_call.1} parent=15 // pred_check_branch
          %877 = sbr.rel (%p875) target = $region56
        $region55: #{tpu_custom_call.1} parent=15 // pred_region
          %s878 = sand.u32 %s45, 1
          %s879 = scalar_lea.sflag [#allocation18], %s878
          %s880 = sand.u32 %s381, 1
          %s881 = smul.addr %s880, 16
          %s882 = scalar_lea.vmem [#allocation17], %s881
          %s883 = smul.u32 %s52, 2
          %s884 = sadd.s32 %s883, %s53
          %p885 = scmp.lt.s32.totalorder %s884, 1
          %s886 = scalar_select %p885, %s884, 1
          %s887 = smul.u32 4, %s886
          %s888 = ssub.s32 6, %s887
          %p889 = scmp.lt.s32.totalorder %s888, 4
          %s890 = scalar_select %p889, %s888, 4
          %s891 = smul.u32 4, %s890
          %s892 = ssub.s32 16, %s891
          %s893 = sshll.u32 %s892, 4
          %894 = vsyncadd %s879, %s893
          %p895 = scmp.ne.s32.totalorder 0, %s891
          %s896 = smul.addr %s887, 4
          %s897 = scalar_lea.hbm %s9, %s896
          %s898 = smul.u32 4, %s890
          %s899 = sshll.u32 %s897, 4
          %s900 = int_to_ptr.hbm [resolvable:$true] %s899
          %s901 = sshll.u32 %s882, 4
          %s902 = int_to_ptr.vmem [resolvable:$true] %s901
          %s903 = sshll.u32 %s898, 4
          %907 = dma.hbm_to_vmem [thread:$0]  (%p895), %s900, %s903, %s902, %s879, 64, 64, 4
        $region56: #{tpu_custom_call.1} parent=15 // pred_fallthru
          _
        // Predicated region
        $region57: #{tpu_custom_call.1} parent=15 // pred_check
          %p908 = pneg %p425
        $region58: #{tpu_custom_call.1} parent=15 // pred_check_branch
          %910 = sbr.rel (%p908) target = $region60
        $region59: #{tpu_custom_call.1} parent=15 // pred_region
          %s911 = sand.u32 %s45, 1
          %s912 = scalar_lea.sflag [#allocation18], %s911
          %s913 = sand.u32 %s415, 1
          %s914 = smul.addr %s913, 16
          %s915 = scalar_lea.vmem [#allocation19], %s914
          %s916 = smul.u32 %s52, 2
          %s917 = sadd.s32 %s916, %s53
          %p918 = scmp.lt.s32.totalorder %s917, 1
          %s919 = scalar_select %p918, %s917, 1
          %s920 = smul.u32 4, %s919
          %s921 = ssub.s32 6, %s920
          %p922 = scmp.lt.s32.totalorder %s921, 4
          %s923 = scalar_select %p922, %s921, 4
          %s924 = smul.u32 4, %s923
          %s925 = ssub.s32 16, %s924
          %s926 = sshll.u32 %s925, 4
          %927 = vsyncadd %s912, %s926
          %p928 = scmp.ne.s32.totalorder 0, %s924
          %s929 = smul.addr %s920, 4
          %s930 = scalar_lea.hbm %s10, %s929
          %s931 = smul.u32 4, %s923
          %s932 = sshll.u32 %s930, 4
          %s933 = int_to_ptr.hbm [resolvable:$true] %s932
          %s934 = sshll.u32 %s915, 4
          %s935 = int_to_ptr.vmem [resolvable:$true] %s934
          %s936 = sshll.u32 %s931, 4
          %940 = dma.hbm_to_vmem [thread:$0]  (%p928), %s933, %s936, %s935, %s912, 64, 64, 4
        $region60: #{tpu_custom_call.1} parent=15 // pred_fallthru
          _
        // Predicated region
        $region61: #{tpu_custom_call.1} parent=15 // pred_check
          %p941 = pneg %p459
        $region62: #{tpu_custom_call.1} parent=15 // pred_check_branch
          %943 = sbr.rel (%p941) target = $region64
        $region63: #{tpu_custom_call.1} parent=15 // pred_region
          %s944 = sand.u32 %s45, 1
          %s945 = scalar_lea.sflag [#allocation21], %s944
          %s946 = sand.u32 %s449, 1
          %s947 = smul.addr %s946, 16
          %s948 = scalar_lea.vmem [#allocation20], %s947
          %s949 = smul.u32 %s52, 2
          %s950 = sadd.s32 %s949, %s53
          %p951 = scmp.lt.s32.totalorder %s950, 1
          %s952 = scalar_select %p951, %s950, 1
          %s953 = smul.u32 4, %s952
          %s954 = ssub.s32 6, %s953
          %p955 = scmp.lt.s32.totalorder %s954, 4
          %s956 = scalar_select %p955, %s954, 4
          %s957 = smul.u32 4, %s956
          %s958 = ssub.s32 16, %s957
          %s959 = sshll.u32 %s958, 4
          %960 = vsyncadd %s945, %s959
          %p961 = scmp.ne.s32.totalorder 0, %s957
          %s962 = smul.addr %s953, 4
          %s963 = scalar_lea.hbm %s11, %s962
          %s964 = smul.u32 4, %s956
          %s965 = sshll.u32 %s963, 4
          %s966 = int_to_ptr.hbm [resolvable:$true] %s965
          %s967 = sshll.u32 %s948, 4
          %s968 = int_to_ptr.vmem [resolvable:$true] %s967
          %s969 = sshll.u32 %s964, 4
          %973 = dma.hbm_to_vmem [thread:$0]  (%p961), %s966, %s969, %s968, %s945, 64, 64, 4
        $region64: #{tpu_custom_call.1} parent=15 // pred_fallthru
          _
        // Predicated region
        $region65: #{tpu_custom_call.1} parent=15 // pred_check
          %p974 = pneg %p493
        $region66: #{tpu_custom_call.1} parent=15 // pred_check_branch
          %976 = sbr.rel (%p974) target = $region68
        $region67: #{tpu_custom_call.1} parent=15 // pred_region
          #allocation27 [shape = 'u32[6]{0}', space=smem, size = 0x18, scoped, tag = 'DMA stride descriptor']
          %s977 = sand.u32 %s45, 1
          %s978 = scalar_lea.sflag [#allocation21], %s977
          %s979 = sand.u32 %s483, 1
          %s980 = smul.addr %s979, 128
          %s981 = scalar_lea.vmem [#allocation22], %s980
          %s982 = smul.u32 %s52, 2
          %s983 = sadd.s32 %s982, %s53
          %p984 = scmp.lt.s32.totalorder %s983, 1
          %s985 = scalar_select %p984, %s983, 1
          %s986 = smul.u32 4, %s985
          %s987 = ssub.s32 6, %s986
          %p988 = scmp.lt.s32.totalorder %s987, 4
          %s989 = scalar_select %p988, %s987, 4
          %s990 = smul.u32 32, %s989
          %s991 = ssub.s32 128, %s990
          %s992 = sshll.u32 %s991, 4
          %993 = vsyncadd %s978, %s992
          %p994 = scmp.ne.s32.totalorder 0, %s990
          %s995 = smul.addr %s986, 8
          %s996 = scalar_lea.hbm %s12, %s995
          %s997 = smul.u32 8, %s989
          %s998 = smul.u32 %s997, 4
          %s1000 = sshll.u32 1, 14
          %s1001 = sxor.u32 4294967295, %s1000
          %s1003 = sld [smem:[#allocation0]]
          %s1004 = sadd.s32 2, %s1003
          %s1006 = sshll.u32 7, 26
          %s1007 = sxor.u32 4294967295, %s1006
          %s1008 = sand.u32 0, %s1007
          %s1009 = sshll.u32 %s1004, 26
          %s1010 = sor.u32 %s1008, %s1009
          %s1011 = sshll.u32 %s996, 4
          %s1012 = int_to_ptr.hbm [resolvable:$true] %s1011
          %s1013 = sshll.u32 %s981, 4
          %s1014 = int_to_ptr.vmem [resolvable:$true] %s1013
          %s1015 = sshll.u32 %s998, 4
          %1020 = sst [smem:[#allocation27]] 768
          %s1021 = scalar_lea.smem [#allocation27], 1
          %1022 = sst [smem:[%s1021]] 512
          %s1023 = scalar_lea.smem [#allocation27], 2
          %1024 = sst [smem:[%s1023]] %s989
          %s1025 = scalar_lea.smem [#allocation27], 3
          %1026 = sst [smem:[%s1025]] 128
          %s1027 = scalar_lea.smem [#allocation27], 4
          %1028 = sst [smem:[%s1027]] 128
          %s1029 = scalar_lea.smem [#allocation27], 5
          %1030 = sst [smem:[%s1029]] 8
          %1032 = dma.general (%p994), %s1012, %s1015, %s1014, %s978, [#allocation26], [#allocation27], %s1010, 0
        $region68: #{tpu_custom_call.1} parent=15 // pred_fallthru
          _
        // Predicated region
        $region69: #{tpu_custom_call.1} parent=15 // pred_check
          %p1033 = pneg %p527
        $region70: #{tpu_custom_call.1} parent=15 // pred_check_branch
          %1035 = sbr.rel (%p1033) target = $region72
        $region71: #{tpu_custom_call.1} parent=15 // pred_region
          #allocation29 [shape = 'u32[6]{0}', space=smem, size = 0x18, scoped, tag = 'DMA stride descriptor']
          %s1036 = sand.u32 %s517, 1
          %s1037 = scalar_lea.sflag [#allocation24], %s1036
          %s1038 = sand.u32 %s517, 1
          %s1039 = smul.addr %s1038, 64
          %s1040 = scalar_lea.vmem [#allocation23], %s1039
          %s1041 = smul.u32 %s52, 2
          %s1042 = sadd.s32 %s1041, %s53
          %p1043 = scmp.lt.s32.totalorder %s1042, 1
          %s1044 = scalar_select %p1043, %s1042, 1
          %s1045 = smul.u32 4, %s1044
          %s1046 = ssub.s32 6, %s1045
          %p1047 = scmp.lt.s32.totalorder %s1046, 4
          %s1048 = scalar_select %p1047, %s1046, 4
          %s1049 = smul.u32 16, %s1048
          %s1050 = ssub.s32 64, %s1049
          %s1051 = sshll.u32 %s1050, 4
          %1052 = vsyncadd %s1037, %s1051
          %p1053 = scmp.ne.s32.totalorder 0, %s1049
          %s1054 = smul.addr %s1045, 4
          %s1055 = scalar_lea.hbm %s13, %s1054
          %s1056 = smul.u32 4, %s1048
          %s1057 = smul.u32 %s1056, 4
          %s1059 = sshll.u32 1, 14
          %s1060 = sxor.u32 4294967295, %s1059
          %s1062 = sld [smem:[#allocation0]]
          %s1063 = sadd.s32 2, %s1062
          %s1065 = sshll.u32 7, 26
          %s1066 = sxor.u32 4294967295, %s1065
          %s1067 = sand.u32 0, %s1066
          %s1068 = sshll.u32 %s1063, 26
          %s1069 = sor.u32 %s1067, %s1068
          %s1070 = sshll.u32 %s1055, 4
          %s1071 = int_to_ptr.hbm [resolvable:$true] %s1070
          %s1072 = sshll.u32 %s1040, 4
          %s1073 = int_to_ptr.vmem [resolvable:$true] %s1072
          %s1074 = sshll.u32 %s1057, 4
          %1079 = sst [smem:[#allocation29]] 384
          %s1080 = scalar_lea.smem [#allocation29], 1
          %1081 = sst [smem:[%s1080]] 256
          %s1082 = scalar_lea.smem [#allocation29], 2
          %1083 = sst [smem:[%s1082]] %s1048
          %s1084 = scalar_lea.smem [#allocation29], 3
          %1085 = sst [smem:[%s1084]] 64
          %s1086 = scalar_lea.smem [#allocation29], 4
          %1087 = sst [smem:[%s1086]] 64
          %s1088 = scalar_lea.smem [#allocation29], 5
          %1089 = sst [smem:[%s1088]] 4
          %1091 = dma.general (%p1053), %s1071, %s1074, %s1073, %s1037, [#allocation28], [#allocation29], %s1069, 0
        $region72: #{tpu_custom_call.1} parent=15 // pred_fallthru
          _
      $region16: #{tpu_custom_call.1} parent=5 // pred_fallthru
        _
      %p1092 = scmp.le.s32.totalorder 1, %s45
      %p1093 = scmp.lt.s32.totalorder %s45, 3
      %p1094 = pnand %p1092, %p1093
      %p1095 = pneg %p1094
      // Predicated region
      $region73: #{tpu_custom_call.1} parent=5 // pred_check
        _
      $region74: #{tpu_custom_call.1} parent=5 // pred_check_branch
        %1097 = sbr.rel (%p1094) target = $region76
      $region75: #{tpu_custom_call.1} parent=5 // pred_region
        %s1098 = ssub.s32 %s45, 1
        %s1099 = sand.u32 %s78, 1
        %s1100 = scalar_lea.sflag [#allocation3], %s1099
        %s1101 = sand.u32 %s78, 1
        %s1102 = smul.addr %s1101, 32
        %s1103 = scalar_lea.vmem [#allocation2], %s1102
        // Predicated region
        $region77: #{tpu_custom_call.1} parent=75 // pred_check
          %p1104 = pneg %p91
        $region78: #{tpu_custom_call.1} parent=75 // pred_check_branch
          %1106 = sbr.rel (%p1104) target = $region80
        $region79: #{tpu_custom_call.1} parent=75 // pred_region
          %1108 = dma.done %s1100, 512
        $region80: #{tpu_custom_call.1} parent=75 // pred_fallthru
          _
        %s1109 = sand.u32 %s50, 1
        %s1110 = scalar_lea.sflag [#allocation6], %s1109
        %s1111 = sand.u32 %s112, 1
        %s1112 = smul.addr %s1111, 32
        %s1113 = scalar_lea.vmem [#allocation5], %s1112
        // Predicated region
        $region81: #{tpu_custom_call.1} parent=75 // pred_check
          %p1114 = pneg %p125
        $region82: #{tpu_custom_call.1} parent=75 // pred_check_branch
          %1116 = sbr.rel (%p1114) target = $region84
        $region83: #{tpu_custom_call.1} parent=75 // pred_region
          %1118 = dma.done %s1110, 512
        $region84: #{tpu_custom_call.1} parent=75 // pred_fallthru
          _
        %s1119 = sand.u32 %s50, 1
        %s1120 = scalar_lea.sflag [#allocation6], %s1119
        %s1121 = sand.u32 %s146, 1
        %s1122 = smul.addr %s1121, 32
        %s1123 = scalar_lea.vmem [#allocation7], %s1122
        // Predicated region
        $region85: #{tpu_custom_call.1} parent=75 // pred_check
          %p1124 = pneg %p159
        $region86: #{tpu_custom_call.1} parent=75 // pred_check_branch
          %1126 = sbr.rel (%p1124) target = $region88
        $region87: #{tpu_custom_call.1} parent=75 // pred_region
          %1128 = dma.done %s1120, 512
        $region88: #{tpu_custom_call.1} parent=75 // pred_fallthru
          _
        %s1129 = sand.u32 %s50, 1
        %s1130 = scalar_lea.sflag [#allocation9], %s1129
        %s1131 = sand.u32 %s180, 1
        %s1132 = smul.addr %s1131, 32
        %s1133 = scalar_lea.vmem [#allocation8], %s1132
        // Predicated region
        $region89: #{tpu_custom_call.1} parent=75 // pred_check
          %p1134 = pneg %p193
        $region90: #{tpu_custom_call.1} parent=75 // pred_check_branch
          %1136 = sbr.rel (%p1134) target = $region92
        $region91: #{tpu_custom_call.1} parent=75 // pred_region
          %1138 = dma.done %s1130, 512
        $region92: #{tpu_custom_call.1} parent=75 // pred_fallthru
          _
        %s1139 = sand.u32 %s50, 1
        %s1140 = scalar_lea.sflag [#allocation9], %s1139
        %s1141 = sand.u32 %s214, 1
        %s1142 = smul.addr %s1141, 32
        %s1143 = scalar_lea.vmem [#allocation10], %s1142
        // Predicated region
        $region93: #{tpu_custom_call.1} parent=75 // pred_check
          %p1144 = pneg %p227
        $region94: #{tpu_custom_call.1} parent=75 // pred_check_branch
          %1146 = sbr.rel (%p1144) target = $region96
        $region95: #{tpu_custom_call.1} parent=75 // pred_region
          %1148 = dma.done %s1140, 512
        $region96: #{tpu_custom_call.1} parent=75 // pred_fallthru
          _
        %s1149 = sand.u32 %s50, 1
        %s1150 = scalar_lea.sflag [#allocation12], %s1149
        %s1151 = sand.u32 %s248, 1
        %s1152 = smul.addr %s1151, 32
        %s1153 = scalar_lea.vmem [#allocation11], %s1152
        // Predicated region
        $region97: #{tpu_custom_call.1} parent=75 // pred_check
          %p1154 = pneg %p261
        $region98: #{tpu_custom_call.1} parent=75 // pred_check_branch
          %1156 = sbr.rel (%p1154) target = $region100
        $region99: #{tpu_custom_call.1} parent=75 // pred_region
          %1158 = dma.done %s1150, 512
        $region100: #{tpu_custom_call.1} parent=75 // pred_fallthru
          _
        %s1159 = sand.u32 %s50, 1
        %s1160 = scalar_lea.sflag [#allocation12], %s1159
        %s1161 = sand.u32 %s282, 1
        %s1162 = smul.addr %s1161, 32
        %s1163 = scalar_lea.vmem [#allocation13], %s1162
        // Predicated region
        $region101: #{tpu_custom_call.1} parent=75 // pred_check
          %p1164 = pneg %p295
        $region102: #{tpu_custom_call.1} parent=75 // pred_check_branch
          %1166 = sbr.rel (%p1164) target = $region104
        $region103: #{tpu_custom_call.1} parent=75 // pred_region
          %1168 = dma.done %s1160, 512
        $region104: #{tpu_custom_call.1} parent=75 // pred_fallthru
          _
        %s1169 = sand.u32 %s50, 1
        %s1170 = scalar_lea.sflag [#allocation15], %s1169
        %s1171 = sand.u32 %s316, 1
        %s1172 = smul.addr %s1171, 32
        %s1173 = scalar_lea.vmem [#allocation14], %s1172
        // Predicated region
        $region105: #{tpu_custom_call.1} parent=75 // pred_check
          %p1174 = pneg %p329
        $region106: #{tpu_custom_call.1} parent=75 // pred_check_branch
          %1176 = sbr.rel (%p1174) target = $region108
        $region107: #{tpu_custom_call.1} parent=75 // pred_region
          %1178 = dma.done %s1170, 512
        $region108: #{tpu_custom_call.1} parent=75 // pred_fallthru
          _
        %s1179 = sand.u32 %s50, 1
        %s1180 = scalar_lea.sflag [#allocation15], %s1179
        %s1181 = sand.u32 %s350, 1
        %s1182 = smul.addr %s1181, 32
        %s1183 = scalar_lea.vmem [#allocation16], %s1182
        // Predicated region
        $region109: #{tpu_custom_call.1} parent=75 // pred_check
          %p1184 = pneg %p363
        $region110: #{tpu_custom_call.1} parent=75 // pred_check_branch
          %1186 = sbr.rel (%p1184) target = $region112
        $region111: #{tpu_custom_call.1} parent=75 // pred_region
          %1188 = dma.done %s1180, 512
        $region112: #{tpu_custom_call.1} parent=75 // pred_fallthru
          _
        %s1189 = sand.u32 %s50, 1
        %s1190 = scalar_lea.sflag [#allocation18], %s1189
        %s1191 = sand.u32 %s384, 1
        %s1192 = smul.addr %s1191, 16
        %s1193 = scalar_lea.vmem [#allocation17], %s1192
        // Predicated region
        $region113: #{tpu_custom_call.1} parent=75 // pred_check
          %p1194 = pneg %p397
        $region114: #{tpu_custom_call.1} parent=75 // pred_check_branch
          %1196 = sbr.rel (%p1194) target = $region116
        $region115: #{tpu_custom_call.1} parent=75 // pred_region
          %1198 = dma.done %s1190, 256
        $region116: #{tpu_custom_call.1} parent=75 // pred_fallthru
          _
        %s1199 = sand.u32 %s50, 1
        %s1200 = scalar_lea.sflag [#allocation18], %s1199
        %s1201 = sand.u32 %s418, 1
        %s1202 = smul.addr %s1201, 16
        %s1203 = scalar_lea.vmem [#allocation19], %s1202
        // Predicated region
        $region117: #{tpu_custom_call.1} parent=75 // pred_check
          %p1204 = pneg %p431
        $region118: #{tpu_custom_call.1} parent=75 // pred_check_branch
          %1206 = sbr.rel (%p1204) target = $region120
        $region119: #{tpu_custom_call.1} parent=75 // pred_region
          %1208 = dma.done %s1200, 256
        $region120: #{tpu_custom_call.1} parent=75 // pred_fallthru
          _
        %s1209 = sand.u32 %s50, 1
        %s1210 = scalar_lea.sflag [#allocation21], %s1209
        %s1211 = sand.u32 %s452, 1
        %s1212 = smul.addr %s1211, 16
        %s1213 = scalar_lea.vmem [#allocation20], %s1212
        // Predicated region
        $region121: #{tpu_custom_call.1} parent=75 // pred_check
          %p1214 = pneg %p465
        $region122: #{tpu_custom_call.1} parent=75 // pred_check_branch
          %1216 = sbr.rel (%p1214) target = $region124
        $region123: #{tpu_custom_call.1} parent=75 // pred_region
          %1218 = dma.done %s1210, 256
        $region124: #{tpu_custom_call.1} parent=75 // pred_fallthru
          _
        %s1219 = sand.u32 %s50, 1
        %s1220 = scalar_lea.sflag [#allocation21], %s1219
        %s1221 = sand.u32 %s486, 1
        %s1222 = smul.addr %s1221, 128
        %s1223 = scalar_lea.vmem [#allocation22], %s1222
        // Predicated region
        $region125: #{tpu_custom_call.1} parent=75 // pred_check
          %p1224 = pneg %p499
        $region126: #{tpu_custom_call.1} parent=75 // pred_check_branch
          %1226 = sbr.rel (%p1224) target = $region128
        $region127: #{tpu_custom_call.1} parent=75 // pred_region
          %1228 = dma.done %s1220, 2048
        $region128: #{tpu_custom_call.1} parent=75 // pred_fallthru
          _
        %s1229 = sand.u32 %s520, 1
        %s1230 = scalar_lea.sflag [#allocation24], %s1229
        %s1231 = sand.u32 %s520, 1
        %s1232 = smul.addr %s1231, 64
        %s1233 = scalar_lea.vmem [#allocation23], %s1232
        // Predicated region
        $region129: #{tpu_custom_call.1} parent=75 // pred_check
          %p1234 = pneg %p533
        $region130: #{tpu_custom_call.1} parent=75 // pred_check_branch
          %1236 = sbr.rel (%p1234) target = $region132
        $region131: #{tpu_custom_call.1} parent=75 // pred_region
          %1238 = dma.done %s1230, 1024
        $region132: #{tpu_custom_call.1} parent=75 // pred_fallthru
          _
        %s1239 = sand.u32 %s78, 1
        %s1240 = scalar_lea.sflag [#allocation3], %s1239
        %s1241 = sand.u32 %s78, 1
        %s1242 = smul.addr %s1241, 32
        %s1243 = scalar_lea.vmem [#allocation2], %s1242
        %p1244 = pneg %p91
        %p1245 = pneg %p88
        %s1246 = sand.u32 %s50, 1
        %s1247 = scalar_lea.sflag [#allocation6], %s1246
        %s1248 = sand.u32 %s112, 1
        %s1249 = smul.addr %s1248, 32
        %s1250 = scalar_lea.vmem [#allocation5], %s1249
        %p1251 = pneg %p125
        %p1252 = pneg %p122
        %s1253 = sand.u32 %s50, 1
        %s1254 = scalar_lea.sflag [#allocation6], %s1253
        %s1255 = sand.u32 %s146, 1
        %s1256 = smul.addr %s1255, 32
        %s1257 = scalar_lea.vmem [#allocation7], %s1256
        %p1258 = pneg %p159
        %p1259 = pneg %p156
        %s1260 = sand.u32 %s50, 1
        %s1261 = scalar_lea.sflag [#allocation9], %s1260
        %s1262 = sand.u32 %s180, 1
        %s1263 = smul.addr %s1262, 32
        %s1264 = scalar_lea.vmem [#allocation8], %s1263
        %p1265 = pneg %p193
        %p1266 = pneg %p190
        %s1267 = sand.u32 %s50, 1
        %s1268 = scalar_lea.sflag [#allocation9], %s1267
        %s1269 = sand.u32 %s214, 1
        %s1270 = smul.addr %s1269, 32
        %s1271 = scalar_lea.vmem [#allocation10], %s1270
        %p1272 = pneg %p227
        %p1273 = pneg %p224
        %s1274 = sand.u32 %s50, 1
        %s1275 = scalar_lea.sflag [#allocation12], %s1274
        %s1276 = sand.u32 %s248, 1
        %s1277 = smul.addr %s1276, 32
        %s1278 = scalar_lea.vmem [#allocation11], %s1277
        %p1279 = pneg %p261
        %p1280 = pneg %p258
        %s1281 = sand.u32 %s50, 1
        %s1282 = scalar_lea.sflag [#allocation12], %s1281
        %s1283 = sand.u32 %s282, 1
        %s1284 = smul.addr %s1283, 32
        %s1285 = scalar_lea.vmem [#allocation13], %s1284
        %p1286 = pneg %p295
        %p1287 = pneg %p292
        %s1288 = sand.u32 %s50, 1
        %s1289 = scalar_lea.sflag [#allocation15], %s1288
        %s1290 = sand.u32 %s316, 1
        %s1291 = smul.addr %s1290, 32
        %s1292 = scalar_lea.vmem [#allocation14], %s1291
        %p1293 = pneg %p329
        %p1294 = pneg %p326
        %s1295 = sand.u32 %s50, 1
        %s1296 = scalar_lea.sflag [#allocation15], %s1295
        %s1297 = sand.u32 %s350, 1
        %s1298 = smul.addr %s1297, 32
        %s1299 = scalar_lea.vmem [#allocation16], %s1298
        %p1300 = pneg %p363
        %p1301 = pneg %p360
        %s1302 = sand.u32 %s50, 1
        %s1303 = scalar_lea.sflag [#allocation18], %s1302
        %s1304 = sand.u32 %s384, 1
        %s1305 = smul.addr %s1304, 16
        %s1306 = scalar_lea.vmem [#allocation17], %s1305
        %p1307 = pneg %p397
        %p1308 = pneg %p394
        %s1309 = sand.u32 %s50, 1
        %s1310 = scalar_lea.sflag [#allocation18], %s1309
        %s1311 = sand.u32 %s418, 1
        %s1312 = smul.addr %s1311, 16
        %s1313 = scalar_lea.vmem [#allocation19], %s1312
        %p1314 = pneg %p431
        %p1315 = pneg %p428
        %s1316 = sand.u32 %s50, 1
        %s1317 = scalar_lea.sflag [#allocation21], %s1316
        %s1318 = sand.u32 %s452, 1
        %s1319 = smul.addr %s1318, 16
        %s1320 = scalar_lea.vmem [#allocation20], %s1319
        %p1321 = pneg %p465
        %p1322 = pneg %p462
        %s1323 = sand.u32 %s50, 1
        %s1324 = scalar_lea.sflag [#allocation21], %s1323
        %s1325 = sand.u32 %s486, 1
        %s1326 = smul.addr %s1325, 128
        %s1327 = scalar_lea.vmem [#allocation22], %s1326
        %p1328 = pneg %p499
        %p1329 = pneg %p496
        %s1330 = sand.u32 %s520, 1
        %s1331 = scalar_lea.sflag [#allocation24], %s1330
        %s1332 = sand.u32 %s520, 1
        %s1333 = smul.addr %s1332, 64
        %s1334 = scalar_lea.vmem [#allocation23], %s1333
        %p1335 = pneg %p533
        %p1336 = pneg %p530
        %p1337 = pneg %p559
        %p1338 = pneg %p556
        %s1339 = smul.u32 %s54, 2
        %s1340 = sadd.s32 %s1339, %s55
        %p1341 = scmp.lt.s32.totalorder %s1340, 1
        %s1342 = scalar_select %p1341, %s1340, 1
        %s1343 = smul.u32 4, %s1342
        %s1344 = ssub.s32 6, %s1343
        %p1345 = scmp.lt.s32.totalorder %s1344, 4
        %s1346 = scalar_select %p1345, %s1344, 4
        %s1347 = smul.u32 8, %s1346
        %s1348 = smul.u32 %s54, 2
        %s1349 = sadd.s32 %s1348, %s55
        %p1350 = scmp.lt.s32.totalorder %s1349, 1
        %s1351 = scalar_select %p1350, %s1349, 1
        %s1352 = smul.u32 4, %s1351
        %s1353 = ssub.s32 6, %s1352
        %p1354 = scmp.lt.s32.totalorder %s1353, 4
        %s1355 = scalar_select %p1354, %s1353, 4
        %s1356 = smul.u32 8, %s1355
        %s1357 = smul.u32 %s54, 2
        %s1358 = sadd.s32 %s1357, %s55
        %p1359 = scmp.lt.s32.totalorder %s1358, 1
        %s1360 = scalar_select %p1359, %s1358, 1
        %s1361 = smul.u32 4, %s1360
        %s1362 = ssub.s32 6, %s1361
        %p1363 = scmp.lt.s32.totalorder %s1362, 4
        %s1364 = scalar_select %p1363, %s1362, 4
        %s1365 = smul.u32 8, %s1364
        %s1366 = smul.u32 %s54, 2
        %s1367 = sadd.s32 %s1366, %s55
        %p1368 = scmp.lt.s32.totalorder %s1367, 1
        %s1369 = scalar_select %p1368, %s1367, 1
        %s1370 = smul.u32 4, %s1369
        %s1371 = ssub.s32 6, %s1370
        %p1372 = scmp.lt.s32.totalorder %s1371, 4
        %s1373 = scalar_select %p1372, %s1371, 4
        %s1374 = smul.u32 8, %s1373
        %s1375 = smul.u32 %s54, 2
        %s1376 = sadd.s32 %s1375, %s55
        %p1377 = scmp.lt.s32.totalorder %s1376, 1
        %s1378 = scalar_select %p1377, %s1376, 1
        %s1379 = smul.u32 4, %s1378
        %s1380 = ssub.s32 6, %s1379
        %p1381 = scmp.lt.s32.totalorder %s1380, 4
        %s1382 = scalar_select %p1381, %s1380, 4
        %s1383 = smul.u32 8, %s1382
        %s1384 = smul.u32 %s54, 2
        %s1385 = sadd.s32 %s1384, %s55
        %p1386 = scmp.lt.s32.totalorder %s1385, 1
        %s1387 = scalar_select %p1386, %s1385, 1
        %s1388 = smul.u32 4, %s1387
        %s1389 = ssub.s32 6, %s1388
        %p1390 = scmp.lt.s32.totalorder %s1389, 4
        %s1391 = scalar_select %p1390, %s1389, 4
        %s1392 = smul.u32 8, %s1391
        %s1393 = smul.u32 %s54, 2
        %s1394 = sadd.s32 %s1393, %s55
        %p1395 = scmp.lt.s32.totalorder %s1394, 1
        %s1396 = scalar_select %p1395, %s1394, 1
        %s1397 = smul.u32 4, %s1396
        %s1398 = ssub.s32 6, %s1397
        %p1399 = scmp.lt.s32.totalorder %s1398, 4
        %s1400 = scalar_select %p1399, %s1398, 4
        %s1401 = smul.u32 8, %s1400
        %s1402 = smul.u32 %s54, 2
        %s1403 = sadd.s32 %s1402, %s55
        %p1404 = scmp.lt.s32.totalorder %s1403, 1
        %s1405 = scalar_select %p1404, %s1403, 1
        %s1406 = smul.u32 4, %s1405
        %s1407 = ssub.s32 6, %s1406
        %p1408 = scmp.lt.s32.totalorder %s1407, 4
        %s1409 = scalar_select %p1408, %s1407, 4
        %s1410 = smul.u32 8, %s1409
        %s1411 = smul.u32 %s54, 2
        %s1412 = sadd.s32 %s1411, %s55
        %p1413 = scmp.lt.s32.totalorder %s1412, 1
        %s1414 = scalar_select %p1413, %s1412, 1
        %s1415 = smul.u32 4, %s1414
        %s1416 = ssub.s32 6, %s1415
        %p1417 = scmp.lt.s32.totalorder %s1416, 4
        %s1418 = scalar_select %p1417, %s1416, 4
        %s1419 = smul.u32 8, %s1418
        %s1420 = smul.u32 %s54, 2
        %s1421 = sadd.s32 %s1420, %s55
        %p1422 = scmp.lt.s32.totalorder %s1421, 1
        %s1423 = scalar_select %p1422, %s1421, 1
        %s1424 = smul.u32 4, %s1423
        %s1425 = ssub.s32 6, %s1424
        %p1426 = scmp.lt.s32.totalorder %s1425, 4
        %s1427 = scalar_select %p1426, %s1425, 4
        %s1428 = smul.u32 4, %s1427
        %s1429 = smul.u32 %s54, 2
        %s1430 = sadd.s32 %s1429, %s55
        %p1431 = scmp.lt.s32.totalorder %s1430, 1
        %s1432 = scalar_select %p1431, %s1430, 1
        %s1433 = smul.u32 4, %s1432
        %s1434 = ssub.s32 6, %s1433
        %p1435 = scmp.lt.s32.totalorder %s1434, 4
        %s1436 = scalar_select %p1435, %s1434, 4
        %s1437 = smul.u32 4, %s1436
        %s1438 = smul.u32 %s54, 2
        %s1439 = sadd.s32 %s1438, %s55
        %p1440 = scmp.lt.s32.totalorder %s1439, 1
        %s1441 = scalar_select %p1440, %s1439, 1
        %s1442 = smul.u32 4, %s1441
        %s1443 = ssub.s32 6, %s1442
        %p1444 = scmp.lt.s32.totalorder %s1443, 4
        %s1445 = scalar_select %p1444, %s1443, 4
        %s1446 = smul.u32 4, %s1445
        %s1447 = smul.u32 %s54, 2
        %s1448 = sadd.s32 %s1447, %s55
        %p1449 = scmp.lt.s32.totalorder %s1448, 1
        %s1450 = scalar_select %p1449, %s1448, 1
        %s1451 = smul.u32 4, %s1450
        %s1452 = ssub.s32 6, %s1451
        %p1453 = scmp.lt.s32.totalorder %s1452, 4
        %s1454 = scalar_select %p1453, %s1452, 4
        %s1455 = smul.u32 32, %s1454
        %s1456 = smul.u32 %s54, 2
        %s1457 = sadd.s32 %s1456, %s55
        %p1458 = scmp.lt.s32.totalorder %s1457, 1
        %s1459 = scalar_select %p1458, %s1457, 1
        %s1460 = smul.u32 4, %s1459
        %s1461 = ssub.s32 6, %s1460
        %p1462 = scmp.lt.s32.totalorder %s1461, 4
        %s1463 = scalar_select %p1462, %s1461, 4
        %s1464 = smul.u32 16, %s1463
        %p1465 = scmp.eq.s32.totalorder %s55, 0
        // Predicated region
        $region133: #{tpu_custom_call.1} parent=75 // pred_check
          %p1466 = pneg %p1465
        $region134: #{tpu_custom_call.1} parent=75 // pred_check_branch
          %1468 = sbr.rel (%p1466) target = $region136
        $region135: #{tpu_custom_call.1} parent=75 // pred_region
          %1469 = vst [vmem:[#allocation25] sm:$0xff] 0.0
          %1470 = vst [vmem:[#allocation25 + $0x8] sm:$0xff] 0.0
          %1471 = vst [vmem:[#allocation25 + $0x10] sm:$0xff] 0.0
          %1472 = vst [vmem:[#allocation25 + $0x18] sm:$0xff] 0.0
          %1473 = vst [vmem:[#allocation25 + $0x20] sm:$0xff] 0.0
          %1474 = vst [vmem:[#allocation25 + $0x28] sm:$0xff] 0.0
        $region136: #{tpu_custom_call.1} parent=75 // pred_fallthru
          _
        %s1475 = smul.u32 %s54, 2
        %s1476 = sadd.s32 %s1475, %s55
        %s1477 = smul.u32 %s1476, 32
        %v1478 = vld [vmem:[%s1203] sm:$0xf]
        %v1479 = vld [vmem:[%s1203 + $0x4] sm:$0xf]
        %v1480 = vld [vmem:[%s1203 + $0x8] sm:$0xf]
        %v1481 = vld [vmem:[%s1203 + $0xc] sm:$0xf]
        %v1482 = vunpack.c.l.bf16 %v1478
        %v1483 = vunpack.c.l.bf16 %v1479
        %v1484 = vunpack.c.l.bf16 %v1480
        %v1485 = vunpack.c.l.bf16 %v1481
        %v1486 = vld [vmem:[%s1213] sm:$0xf]
        %v1487 = vld [vmem:[%s1213 + $0x4] sm:$0xf]
        %v1488 = vld [vmem:[%s1213 + $0x8] sm:$0xf]
        %v1489 = vld [vmem:[%s1213 + $0xc] sm:$0xf]
        %v1490 = vunpack.c.l.bf16 %v1486
        %v1491 = vunpack.c.l.bf16 %v1487
        %v1492 = vunpack.c.l.bf16 %v1488
        %v1493 = vunpack.c.l.bf16 %v1489
        %v1494 = vld [vmem:[%s1103] sm:$0xff]
        %v1495 = vld [vmem:[%s1103 + $0x8] sm:$0xff]
        %v1496 = vld [vmem:[%s1103 + $0x10] sm:$0xff]
        %v1497 = vld [vmem:[%s1103 + $0x18] sm:$0xff]
        %v1498 = vld [vmem:[%s1153] sm:$0xff]
        %v1499 = vld [vmem:[%s1153 + $0x8] sm:$0xff]
        %v1500 = vld [vmem:[%s1153 + $0x10] sm:$0xff]
        %v1501 = vld [vmem:[%s1153 + $0x18] sm:$0xff]
        %v1502 = vsub.f32 %v1494, %v1498
        %v1503 = vsub.f32 %v1495, %v1499
        %v1504 = vsub.f32 %v1496, %v1500
        %v1505 = vsub.f32 %v1497, %v1501
        %v1506 = vmul.f32 %v1502, %v1502
        %v1507 = vmul.f32 %v1503, %v1503
        %v1508 = vmul.f32 %v1504, %v1504
        %v1509 = vmul.f32 %v1505, %v1505
        %v1510 = vld [vmem:[%s1113] sm:$0xff]
        %v1511 = vld [vmem:[%s1113 + $0x8] sm:$0xff]
        %v1512 = vld [vmem:[%s1113 + $0x10] sm:$0xff]
        %v1513 = vld [vmem:[%s1113 + $0x18] sm:$0xff]
        %v1514 = vld [vmem:[%s1163] sm:$0xff]
        %v1515 = vld [vmem:[%s1163 + $0x8] sm:$0xff]
        %v1516 = vld [vmem:[%s1163 + $0x10] sm:$0xff]
        %v1517 = vld [vmem:[%s1163 + $0x18] sm:$0xff]
        %v1518 = vsub.f32 %v1510, %v1514
        %v1519 = vsub.f32 %v1511, %v1515
        %v1520 = vsub.f32 %v1512, %v1516
        %v1521 = vsub.f32 %v1513, %v1517
        %v1522 = vmul.f32 %v1518, %v1518
        %v1523 = vmul.f32 %v1519, %v1519
        %v1524 = vmul.f32 %v1520, %v1520
        %v1525 = vmul.f32 %v1521, %v1521
        %v1526 = vadd.f32 %v1506, %v1522
        %v1527 = vadd.f32 %v1507, %v1523
        %v1528 = vadd.f32 %v1508, %v1524
        %v1529 = vadd.f32 %v1509, %v1525
        %v1530 = vld [vmem:[%s1123] sm:$0xff]
        %v1531 = vld [vmem:[%s1123 + $0x8] sm:$0xff]
        %v1532 = vld [vmem:[%s1123 + $0x10] sm:$0xff]
        %v1533 = vld [vmem:[%s1123 + $0x18] sm:$0xff]
        %v1534 = vld [vmem:[%s1173] sm:$0xff]
        %v1535 = vld [vmem:[%s1173 + $0x8] sm:$0xff]
        %v1536 = vld [vmem:[%s1173 + $0x10] sm:$0xff]
        %v1537 = vld [vmem:[%s1173 + $0x18] sm:$0xff]
        %v1538 = vsub.f32 %v1530, %v1534
        %v1539 = vsub.f32 %v1531, %v1535
        %v1540 = vsub.f32 %v1532, %v1536
        %v1541 = vsub.f32 %v1533, %v1537
        %v1542 = vmul.f32 %v1538, %v1538
        %v1543 = vmul.f32 %v1539, %v1539
        %v1544 = vmul.f32 %v1540, %v1540
        %v1545 = vmul.f32 %v1541, %v1541
        %v1546 = vadd.f32 %v1526, %v1542
        %v1547 = vadd.f32 %v1527, %v1543
        %v1548 = vadd.f32 %v1528, %v1544
        %v1549 = vadd.f32 %v1529, %v1545
        %v1550 = vld [vmem:[%s1133] sm:$0xff]
        %v1551 = vld [vmem:[%s1133 + $0x8] sm:$0xff]
        %v1552 = vld [vmem:[%s1133 + $0x10] sm:$0xff]
        %v1553 = vld [vmem:[%s1133 + $0x18] sm:$0xff]
        %v1554 = vld [vmem:[%s1183] sm:$0xff]
        %v1555 = vld [vmem:[%s1183 + $0x8] sm:$0xff]
        %v1556 = vld [vmem:[%s1183 + $0x10] sm:$0xff]
        %v1557 = vld [vmem:[%s1183 + $0x18] sm:$0xff]
        %v1558 = vsub.f32 %v1550, %v1554
        %v1559 = vsub.f32 %v1551, %v1555
        %v1560 = vsub.f32 %v1552, %v1556
        %v1561 = vsub.f32 %v1553, %v1557
        %v1562 = vmul.f32 %v1558, %v1558
        %v1563 = vmul.f32 %v1559, %v1559
        %v1564 = vmul.f32 %v1560, %v1560
        %v1565 = vmul.f32 %v1561, %v1561
        %v1566 = vadd.f32 %v1546, %v1562
        %v1567 = vadd.f32 %v1547, %v1563
        %v1568 = vadd.f32 %v1548, %v1564
        %v1569 = vadd.f32 %v1549, %v1565
        %v1570 = vld [vmem:[%s1143] sm:$0xff]
        %v1571 = vld [vmem:[%s1143 + $0x8] sm:$0xff]
        %v1572 = vld [vmem:[%s1143 + $0x10] sm:$0xff]
        %v1573 = vld [vmem:[%s1143 + $0x18] sm:$0xff]
        %v1574 = vld [vmem:[%s1193] sm:$0xf]
        %v1575 = vld [vmem:[%s1193 + $0x4] sm:$0xf]
        %v1576 = vld [vmem:[%s1193 + $0x8] sm:$0xf]
        %v1577 = vld [vmem:[%s1193 + $0xc] sm:$0xf]
        %v1578 = vunpack.c.l.bf16 %v1574
        %v1579 = vunpack.c.l.bf16 %v1575
        %v1580 = vunpack.c.l.bf16 %v1576
        %v1581 = vunpack.c.l.bf16 %v1577
        %v1582 = vmul.f32 %v1578, %v1570
        %v1583 = vmul.f32 %v1579, %v1571
        %v1584 = vmul.f32 %v1580, %v1572
        %v1585 = vmul.f32 %v1581, %v1573
        %v1586 = vsub.f32 1.0, %v1578
        %v1587 = vsub.f32 1.0, %v1579
        %v1588 = vsub.f32 1.0, %v1580
        %v1589 = vsub.f32 1.0, %v1581
        %v1590 = vsub.f32 1.0, %v1570
        %v1591 = vsub.f32 1.0, %v1571
        %v1592 = vsub.f32 1.0, %v1572
        %v1593 = vsub.f32 1.0, %v1573
        %v1594 = vmul.f32 %v1586, %v1590
        %v1595 = vmul.f32 %v1587, %v1591
        %v1596 = vmul.f32 %v1588, %v1592
        %v1597 = vmul.f32 %v1589, %v1593
        %v1598 = vadd.f32 %v1582, %v1594
        %v1599 = vadd.f32 %v1583, %v1595
        %v1600 = vadd.f32 %v1584, %v1596
        %v1601 = vadd.f32 %v1585, %v1597
        %v1602 = vlog2.pop %v1598
        %v1603 = vmul.f32 %v1602, 0.6931472
        %v1604 = vlog2.pop %v1599
        %v1605 = vmul.f32 %v1604, 0.6931472
        %v1606 = vlog2.pop %v1600
        %v1607 = vmul.f32 %v1606, 0.6931472
        %v1608 = vlog2.pop %v1601
        %v1609 = vmul.f32 %v1608, 0.6931472
        %v1610 = vmax.f32 %v1603, -100.0
        %v1611 = vmax.f32 %v1605, -100.0
        %v1612 = vmax.f32 %v1607, -100.0
        %v1613 = vmax.f32 %v1609, -100.0
        %v1614 = vsub.f32 0.0, %v1610
        %v1615 = vsub.f32 0.0, %v1611
        %v1616 = vsub.f32 0.0, %v1612
        %v1617 = vsub.f32 0.0, %v1613
        %v1618 = vld [vmem:[%s1223] sm:$0xff]
        %v1619 = vld [vmem:[%s1223 + $0x8] sm:$0xff]
        %v1620 = vld [vmem:[%s1223 + $0x10] sm:$0xff]
        %v1621 = vld [vmem:[%s1223 + $0x18] sm:$0xff]
        %v1622 = vld [vmem:[%s1233] sm:$0xf]
        %v1623 = vld [vmem:[%s1233 + $0x4] sm:$0xf]
        %v1624 = vld [vmem:[%s1233 + $0x8] sm:$0xf]
        %v1625 = vld [vmem:[%s1233 + $0xc] sm:$0xf]
        %v1626 = vunpack.c.l.bf16 %v1622
        %v1627 = vunpack.c.l.bf16 %v1623
        %v1628 = vunpack.c.l.bf16 %v1624
        %v1629 = vunpack.c.l.bf16 %v1625
        %v1630 = vmul.f32 %v1626, %v1618
        %v1631 = vmul.f32 %v1627, %v1619
        %v1632 = vmul.f32 %v1628, %v1620
        %v1633 = vmul.f32 %v1629, %v1621
        %v1634 = vsub.f32 1.0, %v1626
        %v1635 = vsub.f32 1.0, %v1627
        %v1636 = vsub.f32 1.0, %v1628
        %v1637 = vsub.f32 1.0, %v1629
        %v1638 = vsub.f32 1.0, %v1618
        %v1639 = vsub.f32 1.0, %v1619
        %v1640 = vsub.f32 1.0, %v1620
        %v1641 = vsub.f32 1.0, %v1621
        %v1642 = vmul.f32 %v1634, %v1638
        %v1643 = vmul.f32 %v1635, %v1639
        %v1644 = vmul.f32 %v1636, %v1640
        %v1645 = vmul.f32 %v1637, %v1641
        %v1646 = vadd.f32 %v1630, %v1642
        %v1647 = vadd.f32 %v1631, %v1643
        %v1648 = vadd.f32 %v1632, %v1644
        %v1649 = vadd.f32 %v1633, %v1645
        %v1650 = vlog2.pop %v1646
        %v1651 = vmul.f32 %v1650, 0.6931472
        %v1652 = vlog2.pop %v1647
        %v1653 = vmul.f32 %v1652, 0.6931472
        %v1654 = vlog2.pop %v1648
        %v1655 = vmul.f32 %v1654, 0.6931472
        %v1656 = vlog2.pop %v1649
        %v1657 = vmul.f32 %v1656, 0.6931472
        %v1658 = vmax.f32 %v1651, -100.0
        %v1659 = vmax.f32 %v1653, -100.0
        %v1660 = vmax.f32 %v1655, -100.0
        %v1661 = vmax.f32 %v1657, -100.0
        %v1662 = vsub.f32 0.0, %v1658
        %v1663 = vsub.f32 0.0, %v1659
        %v1664 = vsub.f32 0.0, %v1660
        %v1665 = vsub.f32 0.0, %v1661
        %v1666 = vadd.f32 %v1662, 0.0
        %v1667 = vadd.f32 %v1663, 0.0
        %v1668 = vadd.f32 %v1664, 0.0
        %v1669 = vadd.f32 %v1665, 0.0
        %s1670 = scalar_lea.vmem %s1223, 32 [#allocation22]
        %v1671 = vld [vmem:[%s1670] sm:$0xff]
        %v1672 = vld [vmem:[%s1670 + $0x8] sm:$0xff]
        %v1673 = vld [vmem:[%s1670 + $0x10] sm:$0xff]
        %v1674 = vld [vmem:[%s1670 + $0x18] sm:$0xff]
        %s1675 = scalar_lea.vmem %s1233, 16 [#allocation23]
        %v1676 = vld [vmem:[%s1675] sm:$0xf]
        %v1677 = vld [vmem:[%s1675 + $0x4] sm:$0xf]
        %v1678 = vld [vmem:[%s1675 + $0x8] sm:$0xf]
        %v1679 = vld [vmem:[%s1675 + $0xc] sm:$0xf]
        %v1680 = vunpack.c.l.bf16 %v1676
        %v1681 = vunpack.c.l.bf16 %v1677
        %v1682 = vunpack.c.l.bf16 %v1678
        %v1683 = vunpack.c.l.bf16 %v1679
        %v1684 = vmul.f32 %v1680, %v1671
        %v1685 = vmul.f32 %v1681, %v1672
        %v1686 = vmul.f32 %v1682, %v1673
        %v1687 = vmul.f32 %v1683, %v1674
        %v1688 = vsub.f32 1.0, %v1680
        %v1689 = vsub.f32 1.0, %v1681
        %v1690 = vsub.f32 1.0, %v1682
        %v1691 = vsub.f32 1.0, %v1683
        %v1692 = vsub.f32 1.0, %v1671
        %v1693 = vsub.f32 1.0, %v1672
        %v1694 = vsub.f32 1.0, %v1673
        %v1695 = vsub.f32 1.0, %v1674
        %v1696 = vmul.f32 %v1688, %v1692
        %v1697 = vmul.f32 %v1689, %v1693
        %v1698 = vmul.f32 %v1690, %v1694
        %v1699 = vmul.f32 %v1691, %v1695
        %v1700 = vadd.f32 %v1684, %v1696
        %v1701 = vadd.f32 %v1685, %v1697
        %v1702 = vadd.f32 %v1686, %v1698
        %v1703 = vadd.f32 %v1687, %v1699
        %v1704 = vlog2.pop %v1700
        %v1705 = vmul.f32 %v1704, 0.6931472
        %v1706 = vlog2.pop %v1701
        %v1707 = vmul.f32 %v1706, 0.6931472
        %v1708 = vlog2.pop %v1702
        %v1709 = vmul.f32 %v1708, 0.6931472
        %v1710 = vlog2.pop %v1703
        %v1711 = vmul.f32 %v1710, 0.6931472
        %v1712 = vmax.f32 %v1705, -100.0
        %v1713 = vmax.f32 %v1707, -100.0
        %v1714 = vmax.f32 %v1709, -100.0
        %v1715 = vmax.f32 %v1711, -100.0
        %v1716 = vsub.f32 0.0, %v1712
        %v1717 = vsub.f32 0.0, %v1713
        %v1718 = vsub.f32 0.0, %v1714
        %v1719 = vsub.f32 0.0, %v1715
        %v1720 = vadd.f32 %v1666, %v1716
        %v1721 = vadd.f32 %v1667, %v1717
        %v1722 = vadd.f32 %v1668, %v1718
        %v1723 = vadd.f32 %v1669, %v1719
        %s1724 = scalar_lea.vmem %s1223, 64 [#allocation22]
        %v1725 = vld [vmem:[%s1724] sm:$0xff]
        %v1726 = vld [vmem:[%s1724 + $0x8] sm:$0xff]
        %v1727 = vld [vmem:[%s1724 + $0x10] sm:$0xff]
        %v1728 = vld [vmem:[%s1724 + $0x18] sm:$0xff]
        %s1729 = scalar_lea.vmem %s1233, 32 [#allocation23]
        %v1730 = vld [vmem:[%s1729] sm:$0xf]
        %v1731 = vld [vmem:[%s1729 + $0x4] sm:$0xf]
        %v1732 = vld [vmem:[%s1729 + $0x8] sm:$0xf]
        %v1733 = vld [vmem:[%s1729 + $0xc] sm:$0xf]
        %v1734 = vunpack.c.l.bf16 %v1730
        %v1735 = vunpack.c.l.bf16 %v1731
        %v1736 = vunpack.c.l.bf16 %v1732
        %v1737 = vunpack.c.l.bf16 %v1733
        %v1738 = vmul.f32 %v1734, %v1725
        %v1739 = vmul.f32 %v1735, %v1726
        %v1740 = vmul.f32 %v1736, %v1727
        %v1741 = vmul.f32 %v1737, %v1728
        %v1742 = vsub.f32 1.0, %v1734
        %v1743 = vsub.f32 1.0, %v1735
        %v1744 = vsub.f32 1.0, %v1736
        %v1745 = vsub.f32 1.0, %v1737
        %v1746 = vsub.f32 1.0, %v1725
        %v1747 = vsub.f32 1.0, %v1726
        %v1748 = vsub.f32 1.0, %v1727
        %v1749 = vsub.f32 1.0, %v1728
        %v1750 = vmul.f32 %v1742, %v1746
        %v1751 = vmul.f32 %v1743, %v1747
        %v1752 = vmul.f32 %v1744, %v1748
        %v1753 = vmul.f32 %v1745, %v1749
        %v1754 = vadd.f32 %v1738, %v1750
        %v1755 = vadd.f32 %v1739, %v1751
        %v1756 = vadd.f32 %v1740, %v1752
        %v1757 = vadd.f32 %v1741, %v1753
        %v1758 = vlog2.pop %v1754
        %v1759 = vmul.f32 %v1758, 0.6931472
        %v1760 = vlog2.pop %v1755
        %v1761 = vmul.f32 %v1760, 0.6931472
        %v1762 = vlog2.pop %v1756
        %v1763 = vmul.f32 %v1762, 0.6931472
        %v1764 = vlog2.pop %v1757
        %v1765 = vmul.f32 %v1764, 0.6931472
        %v1766 = vmax.f32 %v1759, -100.0
        %v1767 = vmax.f32 %v1761, -100.0
        %v1768 = vmax.f32 %v1763, -100.0
        %v1769 = vmax.f32 %v1765, -100.0
        %v1770 = vsub.f32 0.0, %v1766
        %v1771 = vsub.f32 0.0, %v1767
        %v1772 = vsub.f32 0.0, %v1768
        %v1773 = vsub.f32 0.0, %v1769
        %v1774 = vadd.f32 %v1720, %v1770
        %v1775 = vadd.f32 %v1721, %v1771
        %v1776 = vadd.f32 %v1722, %v1772
        %v1777 = vadd.f32 %v1723, %v1773
        %s1778 = scalar_lea.vmem %s1223, 96 [#allocation22]
        %v1779 = vld [vmem:[%s1778] sm:$0xff]
        %v1780 = vld [vmem:[%s1778 + $0x8] sm:$0xff]
        %v1781 = vld [vmem:[%s1778 + $0x10] sm:$0xff]
        %v1782 = vld [vmem:[%s1778 + $0x18] sm:$0xff]
        %s1783 = scalar_lea.vmem %s1233, 48 [#allocation23]
        %v1784 = vld [vmem:[%s1783] sm:$0xf]
        %v1785 = vld [vmem:[%s1783 + $0x4] sm:$0xf]
        %v1786 = vld [vmem:[%s1783 + $0x8] sm:$0xf]
        %v1787 = vld [vmem:[%s1783 + $0xc] sm:$0xf]
        %v1788 = vunpack.c.l.bf16 %v1784
        %v1789 = vunpack.c.l.bf16 %v1785
        %v1790 = vunpack.c.l.bf16 %v1786
        %v1791 = vunpack.c.l.bf16 %v1787
        %v1792 = vmul.f32 %v1788, %v1779
        %v1793 = vmul.f32 %v1789, %v1780
        %v1794 = vmul.f32 %v1790, %v1781
        %v1795 = vmul.f32 %v1791, %v1782
        %v1796 = vsub.f32 1.0, %v1788
        %v1797 = vsub.f32 1.0, %v1789
        %v1798 = vsub.f32 1.0, %v1790
        %v1799 = vsub.f32 1.0, %v1791
        %v1800 = vsub.f32 1.0, %v1779
        %v1801 = vsub.f32 1.0, %v1780
        %v1802 = vsub.f32 1.0, %v1781
        %v1803 = vsub.f32 1.0, %v1782
        %v1804 = vmul.f32 %v1796, %v1800
        %v1805 = vmul.f32 %v1797, %v1801
        %v1806 = vmul.f32 %v1798, %v1802
        %v1807 = vmul.f32 %v1799, %v1803
        %v1808 = vadd.f32 %v1792, %v1804
        %v1809 = vadd.f32 %v1793, %v1805
        %v1810 = vadd.f32 %v1794, %v1806
        %v1811 = vadd.f32 %v1795, %v1807
        %v1812 = vlog2.pop %v1808
        %v1813 = vmul.f32 %v1812, 0.6931472
        %v1814 = vlog2.pop %v1809
        %v1815 = vmul.f32 %v1814, 0.6931472
        %v1816 = vlog2.pop %v1810
        %v1817 = vmul.f32 %v1816, 0.6931472
        %v1818 = vlog2.pop %v1811
        %v1819 = vmul.f32 %v1818, 0.6931472
        %v1820 = vmax.f32 %v1813, -100.0
        %v1821 = vmax.f32 %v1815, -100.0
        %v1822 = vmax.f32 %v1817, -100.0
        %v1823 = vmax.f32 %v1819, -100.0
        %v1824 = vsub.f32 0.0, %v1820
        %v1825 = vsub.f32 0.0, %v1821
        %v1826 = vsub.f32 0.0, %v1822
        %v1827 = vsub.f32 0.0, %v1823
        %v1828 = vadd.f32 %v1774, %v1824
        %v1829 = vadd.f32 %v1775, %v1825
        %v1830 = vadd.f32 %v1776, %v1826
        %v1831 = vadd.f32 %v1777, %v1827
        %v1832 = vmul.f32 %v1482, %v1566
        %v1833 = vmul.f32 %v1483, %v1567
        %v1834 = vmul.f32 %v1484, %v1568
        %v1835 = vmul.f32 %v1485, %v1569
        %v1836 = vmul.f32 %v1482, %v1614
        %v1837 = vmul.f32 %v1483, %v1615
        %v1838 = vmul.f32 %v1484, %v1616
        %v1839 = vmul.f32 %v1485, %v1617
        %v1840 = vmul.f32 %v1490, %v1614
        %v1841 = vmul.f32 %v1491, %v1615
        %v1842 = vmul.f32 %v1492, %v1616
        %v1843 = vmul.f32 %v1493, %v1617
        %v1844 = vmul.f32 %v1482, %v1828
        %v1845 = vmul.f32 %v1483, %v1829
        %v1846 = vmul.f32 %v1484, %v1830
        %v1847 = vmul.f32 %v1485, %v1831
        %v1848 = vlaneseq
        %v1849 = vshrl.u32 %v1848, 7
        %v1850 = vadd.s32 %v1849, 8
        %v1851 = vadd.s32 %v1849, 16
        %v1852 = vadd.s32 %v1849, 24
        %v1853 = vstv %s1477
        %v1854 = vadd.s32 %v1853, %v1849
        %v1855 = vadd.s32 %v1853, %v1850
        %v1856 = vadd.s32 %v1853, %v1851
        %v1857 = vadd.s32 %v1853, %v1852
        %vm1858 = vcmp.lt.s32.totalorder %v1854, 48
        %vm1859 = vcmp.lt.s32.totalorder %v1855, 48
        %vm1860 = vcmp.lt.s32.totalorder %v1856, 48
        %vm1861 = vcmp.lt.s32.totalorder %v1857, 48
        %v1862 = vsel %vm1858, 1, 0
        %v1863 = vsel %vm1859, 1, 0
        %v1864 = vsel %vm1860, 1, 0
        %v1865 = vsel %vm1861, 1, 0
        %vm1866 = vcmp.eq.s32.totalorder %v1862, 1
        %vm1867 = vcmp.eq.s32.totalorder %v1863, 1
        %vm1868 = vcmp.eq.s32.totalorder %v1864, 1
        %vm1869 = vcmp.eq.s32.totalorder %v1865, 1
        %v1870 = vsel %vm1866, %v1832, 0.0
        %v1871 = vsel %vm1867, %v1833, 0.0
        %v1872 = vsel %vm1868, %v1834, 0.0
        %v1873 = vsel %vm1869, %v1835, 0.0
        %v1874 = vsel %vm1866, %v1836, 0.0
        %v1875 = vsel %vm1867, %v1837, 0.0
        %v1876 = vsel %vm1868, %v1838, 0.0
        %v1877 = vsel %vm1869, %v1839, 0.0
        %v1878 = vsel %vm1866, %v1840, 0.0
        %v1879 = vsel %vm1867, %v1841, 0.0
        %v1880 = vsel %vm1868, %v1842, 0.0
        %v1881 = vsel %vm1869, %v1843, 0.0
        %v1882 = vsel %vm1866, %v1844, 0.0
        %v1883 = vsel %vm1867, %v1845, 0.0
        %v1884 = vsel %vm1868, %v1846, 0.0
        %v1885 = vsel %vm1869, %v1847, 0.0
        %v1886 = vsel %vm1866, %v1482, 0.0
        %v1887 = vsel %vm1867, %v1483, 0.0
        %v1888 = vsel %vm1868, %v1484, 0.0
        %v1889 = vsel %vm1869, %v1485, 0.0
        %v1890 = vsel %vm1866, %v1490, 0.0
        %v1891 = vsel %vm1867, %v1491, 0.0
        %v1892 = vsel %vm1868, %v1492, 0.0
        %v1893 = vsel %vm1869, %v1493, 0.0
        %v1894 = vadd.f32 %v1870, %v1871
        %v1895 = vadd.f32 %v1894, %v1872
        %v1896 = vadd.f32 %v1895, %v1873
        %v1897 = vadd.f32 %v1896, 0.0
        %v1898 = vadd.f32 %v1874, %v1875
        %v1899 = vadd.f32 %v1898, %v1876
        %v1900 = vadd.f32 %v1899, %v1877
        %v1901 = vadd.f32 %v1900, 0.0
        %v1902 = vadd.f32 %v1878, %v1879
        %v1903 = vadd.f32 %v1902, %v1880
        %v1904 = vadd.f32 %v1903, %v1881
        %v1905 = vadd.f32 %v1904, 0.0
        %v1906 = vadd.f32 %v1882, %v1883
        %v1907 = vadd.f32 %v1906, %v1884
        %v1908 = vadd.f32 %v1907, %v1885
        %v1909 = vadd.f32 %v1908, 0.0
        %v1910 = vadd.f32 %v1886, %v1887
        %v1911 = vadd.f32 %v1910, %v1888
        %v1912 = vadd.f32 %v1911, %v1889
        %v1913 = vadd.f32 %v1912, 0.0
        %v1914 = vadd.f32 %v1890, %v1891
        %v1915 = vadd.f32 %v1914, %v1892
        %v1916 = vadd.f32 %v1915, %v1893
        %v1917 = vadd.f32 %v1916, 0.0
        %v1918 = vld [vmem:[#allocation25] sm:$0xff]
        %v1919 = vadd.f32 %v1918, %v1897
        %1920 = vst [vmem:[#allocation25] sm:$0xff] %v1919
        %s1921 = scalar_lea.vmem [#allocation25], 8
        %v1922 = vld [vmem:[%s1921] sm:$0xff]
        %v1923 = vadd.f32 %v1922, %v1901
        %1924 = vst [vmem:[%s1921] sm:$0xff] %v1923
        %s1925 = scalar_lea.vmem [#allocation25], 16
        %v1926 = vld [vmem:[%s1925] sm:$0xff]
        %v1927 = vadd.f32 %v1926, %v1905
        %1928 = vst [vmem:[%s1925] sm:$0xff] %v1927
        %s1929 = scalar_lea.vmem [#allocation25], 24
        %v1930 = vld [vmem:[%s1929] sm:$0xff]
        %v1931 = vadd.f32 %v1930, %v1909
        %1932 = vst [vmem:[%s1929] sm:$0xff] %v1931
        %s1933 = scalar_lea.vmem [#allocation25], 32
        %v1934 = vld [vmem:[%s1933] sm:$0xff]
        %v1935 = vadd.f32 %v1934, %v1913
        %1936 = vst [vmem:[%s1933] sm:$0xff] %v1935
        %s1937 = scalar_lea.vmem [#allocation25], 40
        %v1938 = vld [vmem:[%s1937] sm:$0xff]
        %v1939 = vadd.f32 %v1938, %v1917
        %1940 = vst [vmem:[%s1937] sm:$0xff] %v1939
        // Predicated region
        $region137: #{tpu_custom_call.1} parent=75 // pred_check
          %p1941 = pneg %p556
        $region138: #{tpu_custom_call.1} parent=75 // pred_check_branch
          %1943 = sbr.rel (%p1941) target = $region140
        $region139: #{tpu_custom_call.1} parent=75 // pred_region
          %1945 = vsyncadd [#allocation4], 0
          %s1946 = smul.addr %s54, 6
          %s1947 = smul.addr %s1946, 8
          %s1948 = scalar_lea.hbm %s14, %s1947
          %s1949 = sshll.u32 [#allocation25], 4
          %s1950 = int_to_ptr.vmem [resolvable:$true] %s1949
          %s1951 = sshll.u32 %s1948, 4
          %s1952 = int_to_ptr.hbm [resolvable:$true] %s1951
          %1957 = dma.vmem_to_hbm [thread:$0]  %s1950, 768, %s1952, [#allocation4], 128, 128, 8
        $region140: #{tpu_custom_call.1} parent=75 // pred_fallthru
          _
        // Predicated region
        $region141: #{tpu_custom_call.1} parent=75 // pred_check
          %p1958 = pneg %p556
        $region142: #{tpu_custom_call.1} parent=75 // pred_check_branch
          %1960 = sbr.rel (%p1958) target = $region144
        $region143: #{tpu_custom_call.1} parent=75 // pred_region
          %1962 = dma.done [#allocation4], 768
        $region144: #{tpu_custom_call.1} parent=75 // pred_fallthru
          _
      $region76: #{tpu_custom_call.1} parent=5 // pred_fallthru
        _
      %p1963 = scmp.le.s32.totalorder 2, %s45
      // Predicated region
      $region145: #{tpu_custom_call.1} parent=5 // pred_check
        %p1964 = pneg %p1963
      $region146: #{tpu_custom_call.1} parent=5 // pred_check_branch
        %1966 = sbr.rel (%p1964) target = $region148
      $region147: #{tpu_custom_call.1} parent=5 // pred_region
        %s1967 = ssub.s32 %s45, 2
      $region148: #{tpu_custom_call.1} parent=5 // pred_fallthru
        _
    $region6: #{tpu_custom_call.1} parent=1 // loop_footer
      %s49 = sadd.s32 1, %s45
    $region7: #{tpu_custom_call.1} parent=1 // loop_footer_branch
      %44 = sbr.rel target = $region3
    $region8: #{tpu_custom_call.1} parent=1 // loop_exit
      _
    %1968 = vsyncpa [#allocation3], 1
    %s1969 = scalar_lea.sflag [#allocation3], 1
    %1970 = vsyncpa %s1969, 1
    %1971 = vsyncpa [#allocation6], 1
    %s1972 = scalar_lea.sflag [#allocation6], 1
    %1973 = vsyncpa %s1972, 1
    %1974 = vsyncpa [#allocation9], 1
    %s1975 = scalar_lea.sflag [#allocation9], 1
    %1976 = vsyncpa %s1975, 1
    %1977 = vsyncpa [#allocation12], 1
    %s1978 = scalar_lea.sflag [#allocation12], 1
    %1979 = vsyncpa %s1978, 1
    %1980 = vsyncpa [#allocation15], 1
    %s1981 = scalar_lea.sflag [#allocation15], 1
    %1982 = vsyncpa %s1981, 1
    %1983 = vsyncpa [#allocation18], 1
    %s1984 = scalar_lea.sflag [#allocation18], 1
    %1985 = vsyncpa %s1984, 1
    %1986 = vsyncpa [#allocation21], 1
    %s1987 = scalar_lea.sflag [#allocation21], 1
    %1988 = vsyncpa %s1987, 1
    %1989 = vsyncpa [#allocation24], 1
    %s1990 = scalar_lea.sflag [#allocation24], 1
    %1991 = vsyncpa %s1990, 1
    %1992 = vsyncpa [#allocation4], 1
    %s1993 = scalar_lea.sflag [#allocation4], 1
    %1994 = vsyncpa %s1993, 1

</llo_original>
